<compile_context>
chip_gen: v5e
topology: v5e:2x2
jax: 0.10.0
libtpu: 0.0.40
codegen_flags: <defaults>
</compile_context>

<pallas_src>
import math
import functools

import jax
import jax.numpy as jnp
from jax.experimental import pallas as pl
from jax.experimental.pallas import tpu as pltpu

_LN_EPS = 1e-5
_INV_SQRT2 = 1.0 / math.sqrt(2.0)


def _default_approximate_gelu():
    # tanh GELU runs on the EUP (its own bundle slot) -> keeps v6e/v7x on the
    # HBM roofline.  Exact erf is a long VALU polynomial, but on v5e it hides
    # under the memory stall, so keep PyTorch-exact numerics there.
    try:
        dev = jax.devices()[0]
        if dev.platform != "tpu":
            return False
        return "v5" not in dev.device_kind.lower()
    except Exception:
        return False


def _act_drop_norm_kernel(x_ref, w_ref, b_ref, *rest, n_feats, approximate_gelu,
                          has_mask):
    # x_ref:   (1, F_pad, tT) block of the NCL input
    # w_ref/b_ref: (1, F_pad)
    # mask_ref (training only): (1, tT, F_pad) inverted-dropout scale
    # o_ref:   (1, tT, F_pad) NLC output block
    if has_mask:
        mask_ref, o_ref = rest
    else:
        (o_ref,) = rest

    # Fused NCL -> NLC transpose on the XLU, in the packed dtype, then widen
    # on the VPU.  (The LN reductions are routed to the MXU below, so the XLU
    # only carries this single vxpose per tile.)
    x = jnp.transpose(x_ref[0], (1, 0)).astype(jnp.float32)          # (tT, F_pad)
    f_pad = x.shape[-1]

    # 0/1 lane mask selecting the real n_feats lanes (handles F padded to 128).
    lane_ids = jax.lax.broadcasted_iota(jnp.int32, (f_pad, 128), 0)
    col_mask = (lane_ids < n_feats).astype(jnp.float32)              # (F_pad, 128)
    inv_f = 1.0 / float(n_feats)

    # LayerNorm reductions as matmuls against the 0/1 mask: the MXU is idle in
    # this kernel, and this keeps the cross-lane reduce off the XLU slot.
    # HIGHEST precision keeps the f32 sums exact (rhs entries are 0/1).
    mean = jnp.dot(x, col_mask, preferred_element_type=jnp.float32,
                   precision=jax.lax.Precision.HIGHEST)[:, :1] * inv_f
    centered = x - mean
    var = jnp.dot(centered * centered, col_mask,
                  preferred_element_type=jnp.float32,
                  precision=jax.lax.Precision.HIGHEST)[:, :1] * inv_f

    y = centered * jax.lax.rsqrt(var + _LN_EPS)
    y = y * w_ref[...].astype(jnp.float32) + b_ref[...].astype(jnp.float32)

    # GELU: tanh approximation -> EUP (recommended on v6e/v7x);
    # exact erf -> matches PyTorch F.gelu default bit-for-bit-ish.
    if approximate_gelu:
        g = jax.nn.gelu(y, approximate=True)
    else:
        g = 0.5 * y * (1.0 + jax.lax.erf(y * _INV_SQRT2))

    if has_mask:
        # Inverted dropout: mask already carries keep * 1/(1-p) -> one multiply.
        g = g * mask_ref[0].astype(jnp.float32)

    # Partial last T block: pad rows hold unspecified data; rows are
    # independent and the store is masked, so results stay correct.
    o_ref[0] = g.astype(o_ref.dtype)


def act_drop_norm_cnn1d(x, weight, bias, *, dropout_p=0.1, training=False,
                        rng_key=None, seed=0, t_tile=1024,
                        approximate_gelu=None, input_buffer_count=2):
    """x: (B, n_feats, T) -> (B, T, n_feats) = dropout(gelu(LN(x.transpose(1,2))))."""
    B, F, T = x.shape
    if approximate_gelu is None:
        approximate_gelu = _default_approximate_gelu()

    # Lane-dense output: pad n_feats to a multiple of 128 so stores are full
    # vst (not masked vst.msk).  Padded lanes get weight=bias=0, are excluded
    # from the LN statistics in-kernel, and are sliced off on the way out.
    F_pad = max(128, ((F + 127) // 128) * 128)
    if F_pad != F:
        x = jnp.pad(x, ((0, 0), (0, F_pad - F), (0, 0)))
        weight = jnp.pad(weight, (0, F_pad - F))
        bias = jnp.pad(bias, (0, F_pad - F))

    # T tiling: lane axis of the NCL input block -> multiple of 128 or full T.
    if T <= t_tile:
        t_tile = T
    else:
        t_tile = max(128, (t_tile // 128) * 128)

    # v7x megacore: make sure both TensorCores get at least one block.
    if B * pl.cdiv(T, t_tile) < 2 and T >= 256:
        t_tile = max(128, ((pl.cdiv(T, 2) + 127) // 128) * 128)

    use_mask = bool(training) and float(dropout_p) > 0.0

    # VMEM sizing: shrink the tile (not the limit) until double-buffered blocks
    # plus ~10 live f32 temporaries fit the scoped budget on all generations.
    itemsize = jnp.dtype(x.dtype).itemsize

    def vmem_estimate(tt):
        bufs = (input_buffer_count + 2 + (2 if use_mask else 0)) * itemsize
        return F_pad * tt * (bufs + 10 * 4)

    VMEM_BUDGET = 20 << 20
    while vmem_estimate(t_tile) > VMEM_BUDGET and t_tile > 128:
        t_tile = max(128, ((t_tile // 2 + 127) // 128) * 128)

    grid = (B, pl.cdiv(T, t_tile))

    w2 = weight.reshape(1, F_pad).astype(jnp.float32)
    b2 = bias.reshape(1, F_pad).astype(jnp.float32)

    x_spec_kwargs = {}
    if input_buffer_count != 2:
        # Deeper buffering for the strided (1, F_pad, t_tile) NCL read, if a
        # profile shows exposed DMA.
        x_spec_kwargs["pipeline_mode"] = pl.Buffered(input_buffer_count)

    in_specs = [
        pl.BlockSpec((1, F_pad, t_tile), lambda b, t: (b, 0, t), **x_spec_kwargs),
        pl.BlockSpec((1, F_pad), lambda b, t: (0, 0)),
        pl.BlockSpec((1, F_pad), lambda b, t: (0, 0)),
    ]
    args = [x, w2, b2]

    if use_mask:
        if rng_key is None:
            rng_key = jax.random.PRNGKey(seed)
        keep = jax.random.bernoulli(rng_key, 1.0 - float(dropout_p),
                                    (B, T, F_pad))
        scale = jnp.asarray(1.0 / (1.0 - float(dropout_p)), x.dtype)
        mask = keep.astype(x.dtype) * scale
        in_specs.append(pl.BlockSpec((1, t_tile, F_pad), lambda b, t: (b, t, 0)))
        args.append(mask)

    kernel = functools.partial(
        _act_drop_norm_kernel,
        n_feats=F,
        approximate_gelu=bool(approximate_gelu),
        has_mask=use_mask)

    compiler_kwargs = dict(dimension_semantics=("parallel", "parallel"))
    if vmem_estimate(t_tile) > (14 << 20):
        compiler_kwargs["vmem_limit_bytes"] = 28 << 20

    out = pl.pallas_call(
        kernel,
        out_shape=jax.ShapeDtypeStruct((B, T, F_pad), x.dtype),
        grid=grid,
        in_specs=in_specs,
        out_specs=pl.BlockSpec((1, t_tile, F_pad), lambda b, t: (b, t, 0)),
        compiler_params=pltpu.CompilerParams(**compiler_kwargs),
    )(*args)

    if F_pad != F:
        out = out[..., :F]
    return out


def _reference(x, weight, bias, *, approximate):
    # Pure-JAX reference (eval mode: dropout = identity).
    xt = jnp.transpose(x, (0, 2, 1)).astype(jnp.float32)
    mean = jnp.mean(xt, axis=-1, keepdims=True)
    var = jnp.mean((xt - mean) ** 2, axis=-1, keepdims=True)
    y = (xt - mean) * jax.lax.rsqrt(var + _LN_EPS) * weight + bias
    if approximate:
        return jax.nn.gelu(y, approximate=True)
    return 0.5 * y * (1.0 + jax.lax.erf(y * _INV_SQRT2))


if __name__ == "__main__":
    # CNN-front-end-like small shapes; F=128 keeps the lane axis dense.
    B, F, T = 2, 128, 96
    key = jax.random.PRNGKey(0)
    kx, kw, kb, kx2 = jax.random.split(key, 4)

    x = jax.random.normal(kx, (B, F, T), dtype=jnp.float32)
    weight = jnp.ones((F,), jnp.float32) + 0.01 * jax.random.normal(kw, (F,), jnp.float32)
    bias = 0.01 * jax.random.normal(kb, (F,), jnp.float32)

    # Eval mode, exact erf GELU (matches PyTorch F.gelu default).
    out = jax.block_until_ready(
        act_drop_norm_cnn1d(x, weight, bias, dropout_p=0.1, training=False,
                            approximate_gelu=False))
    ref = _reference(x, weight, bias, approximate=False)
    assert out.shape == (B, T, F)
    assert jnp.allclose(out, ref, atol=1e-5, rtol=1e-5), "erf-GELU mismatch"

    # Eval mode, tanh GELU (recommended perf setting on v6e/v7x).
    out_a = jax.block_until_ready(
        act_drop_norm_cnn1d(x, weight, bias, dropout_p=0.1, training=False,
                            approximate_gelu=True))
    ref_a = _reference(x, weight, bias, approximate=True)
    assert jnp.allclose(out_a, ref_a, atol=1e-5, rtol=1e-5), "tanh-GELU mismatch"

    # Non-multiple-of-128 n_feats exercises the pad-to-128 lane-dense path.
    F2, T2 = 80, 48
    x2 = jax.random.normal(kx2, (1, F2, T2), dtype=jnp.float32)
    w2 = jnp.ones((F2,), jnp.float32)
    b2 = jnp.zeros((F2,), jnp.float32)
    out2 = jax.block_until_ready(
        act_drop_norm_cnn1d(x2, w2, b2, training=False, approximate_gelu=False))
    ref2 = _reference(x2, w2, b2, approximate=False)
    assert out2.shape == (1, T2, F2)
    assert jnp.allclose(out2, ref2, atol=1e-5, rtol=1e-5), "padded-F mismatch"

    # Training path (host-side mask, single in-kernel multiply).
    out_tr = jax.block_until_ready(
        act_drop_norm_cnn1d(x, weight, bias, dropout_p=0.1, training=True,
                            rng_key=jax.random.PRNGKey(7)))
    assert out_tr.shape == (B, T, F)

    print("KERNEL_OK")
</pallas_src>

<mosaic_0001>
module attributes {stable_mosaic.version = 11 : i64} {
  func.func @_act_drop_norm_kernel(%arg0: i32, %arg1: i32, %arg2: memref<1x128x96xf32, #tpu.memory_space<vmem>>, %arg3: memref<1x128xf32, #tpu.memory_space<vmem>>, %arg4: memref<1x128xf32, #tpu.memory_space<vmem>>, %arg5: memref<1x96x128xf32, #tpu.memory_space<vmem>>) attributes {dimension_semantics = [#tpu.dimension_semantics<parallel>, #tpu.dimension_semantics<parallel>], iteration_bounds = array<i64: 2, 1>, scalar_prefetch = 0 : i64, scratch_operands = 0 : i64, tpu.core_type = #tpu.core_type<tc>, window_params = [{transform_indices = @transform_0, window_bounds = array<i64: 1, 128, 96>}, {pipeline_mode = #tpu.pipeline_mode<synchronous>, transform_indices = @transform_1, window_bounds = array<i64: 1, 128>}, {pipeline_mode = #tpu.pipeline_mode<synchronous>, transform_indices = @transform_2, window_bounds = array<i64: 1, 128>}, {transform_indices = @transform_3, window_bounds = array<i64: 1, 96, 128>}]} {
    %c0 = arith.constant 0 : index
    %c0_0 = arith.constant 0 : index
    %c0_1 = arith.constant 0 : index
    %0 = vector.load %arg2[%c0, %c0_0, %c0_1] : memref<1x128x96xf32, #tpu.memory_space<vmem>>, vector<1x128x96xf32>
    %1 = vector.shape_cast %0 : vector<1x128x96xf32> to vector<128x96xf32>
    %2 = tpu.transpose %1, [1, 0] : vector<128x96xf32> -> vector<96x128xf32>
    %3 = tpu.iota {dimensions = array<i32: 0>} : vector<128x128xi32>
    %c128_i32 = arith.constant 128 : i32
    %4 = vector.broadcast %c128_i32 : i32 to vector<128x128xi32>
    %5 = arith.cmpi slt, %3, %4 : vector<128x128xi32>
    %6 = arith.extui %5 : vector<128x128xi1> to vector<128x128xi32>
    %7 = arith.sitofp %6 : vector<128x128xi32> to vector<128x128xf32>
    %cst = arith.constant dense<0.000000e+00> : vector<96x128xf32>
    %8 = tpu.matmul %2, %7, %cst {dimension_numbers = #tpu.dot_dimension_numbers<[1], [0], [0], [1], [0, 0, 1, 1], [], []>, precision = #tpu.contract_precision<fp32>} : vector<96x128xf32>, vector<128x128xf32>, vector<96x128xf32> -> vector<96x128xf32>
    %9 = vector.extract_strided_slice %8 {offsets = [0, 0], sizes = [96, 1], strides = [1, 1]} : vector<96x128xf32> to vector<96x1xf32>
    %cst_2 = arith.constant 7.812500e-03 : f32
    %10 = vector.broadcast %cst_2 : f32 to vector<96x1xf32>
    %11 = arith.mulf %9, %10 : vector<96x1xf32>
    %12 = vector.broadcast %11 : vector<96x1xf32> to vector<96x128xf32>
    %13 = arith.subf %2, %12 : vector<96x128xf32>
    %14 = arith.mulf %13, %13 : vector<96x128xf32>
    %cst_3 = arith.constant dense<0.000000e+00> : vector<96x128xf32>
    %15 = tpu.matmul %14, %7, %cst_3 {dimension_numbers = #tpu.dot_dimension_numbers<[1], [0], [0], [1], [0, 0, 1, 1], [], []>, precision = #tpu.contract_precision<fp32>} : vector<96x128xf32>, vector<128x128xf32>, vector<96x128xf32> -> vector<96x128xf32>
    %16 = vector.extract_strided_slice %15 {offsets = [0, 0], sizes = [96, 1], strides = [1, 1]} : vector<96x128xf32> to vector<96x1xf32>
    %cst_4 = arith.constant 7.812500e-03 : f32
    %17 = vector.broadcast %cst_4 : f32 to vector<96x1xf32>
    %18 = arith.mulf %16, %17 : vector<96x1xf32>
    %cst_5 = arith.constant 9.99999974E-6 : f32
    %19 = vector.broadcast %cst_5 : f32 to vector<96x1xf32>
    %20 = arith.addf %18, %19 : vector<96x1xf32>
    %21 = math.rsqrt %20 : vector<96x1xf32>
    %22 = vector.broadcast %21 : vector<96x1xf32> to vector<96x128xf32>
    %23 = arith.mulf %13, %22 : vector<96x128xf32>
    %c0_6 = arith.constant 0 : index
    %c0_7 = arith.constant 0 : index
    %24 = vector.load %arg3[%c0_6, %c0_7] : memref<1x128xf32, #tpu.memory_space<vmem>>, vector<1x128xf32>
    %25 = vector.broadcast %24 : vector<1x128xf32> to vector<96x128xf32>
    %26 = arith.mulf %23, %25 : vector<96x128xf32>
    %c0_8 = arith.constant 0 : index
    %c0_9 = arith.constant 0 : index
    %27 = vector.load %arg4[%c0_8, %c0_9] : memref<1x128xf32, #tpu.memory_space<vmem>>, vector<1x128xf32>
    %28 = vector.broadcast %27 : vector<1x128xf32> to vector<96x128xf32>
    %29 = arith.addf %26, %28 : vector<96x128xf32>
    %cst_10 = arith.constant 5.000000e-01 : f32
    %30 = vector.broadcast %cst_10 : f32 to vector<96x128xf32>
    %31 = arith.mulf %30, %29 : vector<96x128xf32>
    %cst_11 = arith.constant 0.707106769 : f32
    %32 = vector.broadcast %cst_11 : f32 to vector<96x128xf32>
    %33 = arith.mulf %29, %32 : vector<96x128xf32>
    %34 = math.erf %33 : vector<96x128xf32>
    %cst_12 = arith.constant 1.000000e+00 : f32
    %35 = vector.broadcast %cst_12 : f32 to vector<96x128xf32>
    %36 = arith.addf %35, %34 : vector<96x128xf32>
    %37 = arith.mulf %31, %36 : vector<96x128xf32>
    %c0_13 = arith.constant 0 : index
    %c0_14 = arith.constant 0 : index
    %c0_15 = arith.constant 0 : index
    %38 = vector.load %arg5[%c0_13, %c0_14, %c0_15] : memref<1x96x128xf32, #tpu.memory_space<vmem>>, vector<1x96x128xf32>
    %39 = vector.shape_cast %38 : vector<1x96x128xf32> to vector<96x128xf32>
    %40 = vector.shape_cast %37 : vector<96x128xf32> to vector<1x96x128xf32>
    tpu.vector_store %arg5[%c0_13, %c0_14, %c0_15], %40 {strides = array<i32>} : memref<1x96x128xf32, #tpu.memory_space<vmem>>, vector<1x96x128xf32>,
    return
  }
  func.func @transform_0(%arg0: i32, %arg1: i32) -> (i32, i32, i32) {
    %c0_i32 = arith.constant 0 : i32
    %c0_i32_0 = arith.constant 0 : i32
    return %arg0, %c0_i32, %arg1 : i32, i32, i32
  }
  func.func @transform_1(%arg0: i32, %arg1: i32) -> (i32, i32) {
    %c0_i32 = arith.constant 0 : i32
    %c0_i32_0 = arith.constant 0 : i32
    %c0_i32_1 = arith.constant 0 : i32
    return %c0_i32, %c0_i32_0 : i32, i32
  }
  func.func @transform_2(%arg0: i32, %arg1: i32) -> (i32, i32) {
    %c0_i32 = arith.constant 0 : i32
    %c0_i32_0 = arith.constant 0 : i32
    %c0_i32_1 = arith.constant 0 : i32
    return %c0_i32, %c0_i32_0 : i32, i32
  }
  func.func @transform_3(%arg0: i32, %arg1: i32) -> (i32, i32, i32) {
    %c0_i32 = arith.constant 0 : i32
    %c0_i32_0 = arith.constant 0 : i32
    return %arg0, %arg1, %c0_i32 : i32, i32, i32
  }
}

</mosaic_0001>

<llo_original>
// kernel: tpu_custom_call.1
$region0: #{tpu_custom_call.1}
  #allocation0 [shape = 'u32[]', space=smem, size = 0x4, offset = 0x4, fixed_abs, tag = 'smem constant byte address 0x4 - core index']
  #allocation1 [shape = 'u32[72,128]{1,0:T(1,128)}', space=vmem, size = 0x9000, scoped, tag = 'internal scratch']
  %s0 = inlined_call_operand.vmem [shape: f32[2,128,96], index: 0, kind: input, shape index: {}]
  %s1 = inlined_call_operand.vmem [shape: f32[1,128], index: 1, kind: input, shape index: {}]
  %s2 = inlined_call_operand.vmem [shape: f32[1,128], index: 2, kind: input, shape index: {}]
  %s3 = inlined_call_operand.hbm [shape: f32[2,96,128], index: 3, kind: output, shape index: {}]
  %s4 = sld [smem:[#allocation0]]
  $region45: #{tpu_custom_call.1} parent=0
    _
  %s6 = ssub.s32 1, %s4
  %s7 = scalar_select 0, %s6, %s4
  $region1: #{tpu_custom_call.1} parent=0
    #allocation2 [shape = 'u8[98304]{0}', space=vmem, size = 0x18000, scoped, tag = 'output window, operand 0']
    #allocation3 [shape = 's32[2]{0}', space=sflag, size = 0x8, scoped, tag = 'scoped memory for tpu_custom_call.1']
    %8 = vsyncpa [#allocation3], 0
    %s9 = scalar_lea.sflag [#allocation3], 1
    %10 = vsyncpa %s9, 0
    loop: start=0, step=1, limit=4
    $region2: #{tpu_custom_call.1} parent=1 // loop_pre_header
      _
    $region3: #{tpu_custom_call.1} parent=1 // loop_header
      %s12 = sphi 0, %s16
      %p13 = scmp.ge.s32.totalorder %s12, 4
      %s19 = sphi 0, %s31
      %s20 = sphi 0, %s27
      %s21 = sphi 0, %s19
      %s22 = sphi 0, %s20
      %s23 = sphi 0, %s21
      %s24 = sphi 0, %s22
      %s36 = sphi 0, %s38
      %s39 = sphi 0, %s36
      %s40 = sphi 0, %s39
      %s56 = sphi 0, %s40
      %s60 = sphi 0, %s60
      %s62 = sphi 0, %s60
      %s63 = sphi 0, %s62
      %s77 = sphi 0, %s63
      %s81 = sphi 0, %s81
      %s83 = sphi 0, %s81
      %s84 = sphi 0, %s83
      %s98 = sphi 0, %s84
      %s106 = sphi 0, %s108
      %s109 = sphi 0, %s106
      %s110 = sphi 0, %s109
      %s126 = sphi 0, %s110
    $region4: #{tpu_custom_call.1} parent=1 // loop_header_branch
      %15 = sbr.rel (%p13) target = $region8
    $region5: #{tpu_custom_call.1} parent=1 // loop_body
      %s17 = ssub.s32 %s12, 1
      %s18 = ssub.s32 %s12, 2
      %s25 = sadd.s32 1, %s20
      %p26 = scmp.ge.s32.totalorder %s25, 1
      %s27 = scalar_select %p26, 0, %s25
      %s28 = sadd.s32 1, %s19
      %s29 = scalar_select %p26, %s28, %s19
      %p30 = scmp.ge.s32.totalorder %s29, 2
      %s31 = scalar_select %p30, 0, %s29
      %s32 = ssub.s32 %s19, %s31
      %s33 = ssub.s32 %s20, %s27
      %s34 = sor.u32 %s32, %s33
      %p35 = scmp.eq.s32.totalorder %s34, 0
      %s37 = sadd.s32 %s36, 1
      %s38 = scalar_select %p35, %s36, %s37
      %p41 = pneg %p35
      %p42 = scmp.eq.s32.totalorder %s12, 1
      %p43 = por %p41, %p42
      %p44 = scmp.ne.s32.totalorder %s36, %s39
      %p45 = scmp.eq.s32.totalorder %s12, 0
      %p46 = por %p44, %p45
      %p47 = scmp.ne.s32.totalorder %s36, %s39
      %p48 = scmp.eq.s32.totalorder %s17, 1
      %p49 = por %p47, %p48
      %p50 = scmp.ne.s32.totalorder %s39, %s40
      %p51 = scmp.eq.s32.totalorder %s17, 0
      %p52 = por %p50, %p51
      %p53 = scmp.ne.s32.totalorder %s39, %s40
      %p54 = scmp.eq.s32.totalorder %s18, 1
      %p55 = por %p53, %p54
      %p57 = scmp.ne.s32.totalorder %s40, %s56
      %p58 = scmp.eq.s32.totalorder %s18, 0
      %p59 = por %p57, %p58
      %s61 = sadd.s32 %s60, 1
      %p64 = scmp.eq.s32.totalorder %s12, 1
      %p65 = scmp.ne.s32.totalorder %s60, %s62
      %p66 = scmp.eq.s32.totalorder %s12, 0
      %p67 = por %p65, %p66
      %p68 = scmp.ne.s32.totalorder %s60, %s62
      %p69 = scmp.eq.s32.totalorder %s17, 1
      %p70 = por %p68, %p69
      %p71 = scmp.ne.s32.totalorder %s62, %s63
      %p72 = scmp.eq.s32.totalorder %s17, 0
      %p73 = por %p71, %p72
      %p74 = scmp.ne.s32.totalorder %s62, %s63
      %p75 = scmp.eq.s32.totalorder %s18, 1
      %p76 = por %p74, %p75
      %p78 = scmp.ne.s32.totalorder %s63, %s77
      %p79 = scmp.eq.s32.totalorder %s18, 0
      %p80 = por %p78, %p79
      %s82 = sadd.s32 %s81, 1
      %p85 = scmp.eq.s32.totalorder %s12, 1
      %p86 = scmp.ne.s32.totalorder %s81, %s83
      %p87 = scmp.eq.s32.totalorder %s12, 0
      %p88 = por %p86, %p87
      %p89 = scmp.ne.s32.totalorder %s81, %s83
      %p90 = scmp.eq.s32.totalorder %s17, 1
      %p91 = por %p89, %p90
      %p92 = scmp.ne.s32.totalorder %s83, %s84
      %p93 = scmp.eq.s32.totalorder %s17, 0
      %p94 = por %p92, %p93
      %p95 = scmp.ne.s32.totalorder %s83, %s84
      %p96 = scmp.eq.s32.totalorder %s18, 1
      %p97 = por %p95, %p96
      %p99 = scmp.ne.s32.totalorder %s84, %s98
      %p100 = scmp.eq.s32.totalorder %s18, 0
      %p101 = por %p99, %p100
      %s102 = ssub.s32 %s19, %s31
      %s103 = ssub.s32 %s20, %s27
      %s104 = sor.u32 %s102, %s103
      %p105 = scmp.eq.s32.totalorder %s104, 0
      %s107 = sadd.s32 %s106, 1
      %s108 = scalar_select %p105, %s106, %s107
      %p111 = pneg %p105
      %p112 = scmp.eq.s32.totalorder %s12, 1
      %p113 = por %p111, %p112
      %p114 = scmp.ne.s32.totalorder %s106, %s109
      %p115 = scmp.eq.s32.totalorder %s12, 0
      %p116 = por %p114, %p115
      %p117 = scmp.ne.s32.totalorder %s106, %s109
      %p118 = scmp.eq.s32.totalorder %s17, 1
      %p119 = por %p117, %p118
      %p120 = scmp.ne.s32.totalorder %s109, %s110
      %p121 = scmp.eq.s32.totalorder %s17, 0
      %p122 = por %p120, %p121
      %p123 = scmp.ne.s32.totalorder %s109, %s110
      %p124 = scmp.eq.s32.totalorder %s18, 1
      %p125 = por %p123, %p124
      %p127 = scmp.ne.s32.totalorder %s110, %s126
      %p128 = scmp.eq.s32.totalorder %s18, 0
      %p129 = por %p127, %p128
      %p130 = scmp.le.s32.totalorder 1, %s12
      %p131 = scmp.lt.s32.totalorder %s12, 3
      %p132 = pnand %p130, %p131
      %p133 = pneg %p132
      // Predicated region
      $region9: #{tpu_custom_call.1} parent=5 // pred_check
        _
      $region10: #{tpu_custom_call.1} parent=5 // pred_check_branch
        %135 = sbr.rel (%p132) target = $region12
      $region11: #{tpu_custom_call.1} parent=5 // pred_region
        %s136 = ssub.s32 %s12, 1
        // Predicated region
        $region13: #{tpu_custom_call.1} parent=11 // pred_check
          %p137 = pneg %p73
        $region14: #{tpu_custom_call.1} parent=11 // pred_check_branch
          %139 = sbr.rel (%p137) target = $region16
        $region15: #{tpu_custom_call.1} parent=11 // pred_region
          _
        $region16: #{tpu_custom_call.1} parent=11 // pred_fallthru
          _
        // Predicated region
        $region17: #{tpu_custom_call.1} parent=11 // pred_check
          %p140 = pneg %p94
        $region18: #{tpu_custom_call.1} parent=11 // pred_check_branch
          %142 = sbr.rel (%p140) target = $region20
        $region19: #{tpu_custom_call.1} parent=11 // pred_region
          _
        $region20: #{tpu_custom_call.1} parent=11 // pred_fallthru
          _
      $region12: #{tpu_custom_call.1} parent=5 // pred_fallthru
        _
      %p143 = scmp.lt.s32.totalorder %s12, 2
      // Predicated region
      $region21: #{tpu_custom_call.1} parent=5 // pred_check
        %p144 = pneg %p143
      $region22: #{tpu_custom_call.1} parent=5 // pred_check_branch
        %146 = sbr.rel (%p144) target = $region24
      $region23: #{tpu_custom_call.1} parent=5 // pred_region
        // Predicated region
        $region25: #{tpu_custom_call.1} parent=23 // pred_check
          %p147 = pneg %p46
        $region26: #{tpu_custom_call.1} parent=23 // pred_check_branch
          %149 = sbr.rel (%p147) target = $region28
        $region27: #{tpu_custom_call.1} parent=23 // pred_region
          %p150 = scmp.lt.s32.totalorder %s19, 1
          %s151 = scalar_select %p150, %s19, 1
          %p152 = scmp.lt.s32.totalorder %s20, 0
          %s153 = scalar_select %p152, %s20, 0
          %s154 = smul.addr %s151, 16
          %s155 = sadd.s32 %s153, %s154
          %s156 = smul.addr %s155, 8
          %s157 = scalar_lea.vmem %s0, %s156
        $region28: #{tpu_custom_call.1} parent=23 // pred_fallthru
          _
      $region24: #{tpu_custom_call.1} parent=5 // pred_fallthru
        _
      %p158 = scmp.le.s32.totalorder 1, %s12
      %p159 = scmp.lt.s32.totalorder %s12, 3
      %p160 = pnand %p158, %p159
      %p161 = pneg %p160
      // Predicated region
      $region29: #{tpu_custom_call.1} parent=5 // pred_check
        _
      $region30: #{tpu_custom_call.1} parent=5 // pred_check_branch
        %163 = sbr.rel (%p160) target = $region32
      $region31: #{tpu_custom_call.1} parent=5 // pred_region
        %s164 = ssub.s32 %s12, 1
        %p165 = scmp.lt.s32.totalorder %s21, 1
        %s166 = scalar_select %p165, %s21, 1
        %p167 = scmp.lt.s32.totalorder %s22, 0
        %s168 = scalar_select %p167, %s22, 0
        %s169 = smul.addr %s166, 16
        %s170 = sadd.s32 %s168, %s169
        %s171 = smul.addr %s170, 8
        %s172 = scalar_lea.vmem %s0, %s171
        %p173 = pneg %p52
        %p174 = pneg %p49
        %p175 = pneg %p73
        %p176 = pneg %p70
        %p177 = pneg %p94
        %p178 = pneg %p91
        %p179 = pneg %p122
        %p180 = pneg %p119
        %s181 = sand.u32 %s109, 1
        %s182 = scalar_lea.sflag [#allocation3], %s181
        %s183 = sand.u32 %s109, 1
        %s184 = smul.addr %s183, 96
        %s185 = scalar_lea.vmem [#allocation2], %s184
        %p186 = scmp.lt.s32.totalorder %s21, 1
        %s187 = scalar_select %p186, %s21, 1
        %p188 = scmp.lt.s32.totalorder %s22, 0
        %s189 = scalar_select %p188, %s22, 0
        %s190 = smul.addr %s187, 16
        %s191 = sadd.s32 %s189, %s190
        %s192 = smul.addr %s191, 8
        %s193 = scalar_lea.vmem %s0, %s192
        %s194 = smul.u32 12, %s22
        %v195 = vld [vmem:[%s193] sm:$0xff]
        %v196 = vld [vmem:[%s193 + $0x8] sm:$0xff]
        %v197 = vld [vmem:[%s193 + $0x10] sm:$0xff]
        %v198 = vld [vmem:[%s193 + $0x18] sm:$0xff]
        %v199 = vld [vmem:[%s193 + $0x20] sm:$0xff]
        %v200 = vld [vmem:[%s193 + $0x28] sm:$0xff]
        %v201 = vld [vmem:[%s193 + $0x30] sm:$0xff]
        %v202 = vld [vmem:[%s193 + $0x38] sm:$0xff]
        %v203 = vld [vmem:[%s193 + $0x40] sm:$0xff]
        %v204 = vld [vmem:[%s193 + $0x48] sm:$0xff]
        %v205 = vld [vmem:[%s193 + $0x50] sm:$0xff]
        %v206 = vld [vmem:[%s193 + $0x58] sm:$0xff]
        %v207 = vld [vmem:[%s193 + $0x60] sm:$0xff]
        %v208 = vld [vmem:[%s193 + $0x68] sm:$0xff]
        %v209 = vld [vmem:[%s193 + $0x70] sm:$0xff]
        %v210 = vld [vmem:[%s193 + $0x78] sm:$0xff]
        %211 = vxpose.xlu0.b32.start [1/16] %v195, 128
        %212 = vxpose.xlu0.b32.cont [2/16] %v196, 128
        %213 = vxpose.xlu0.b32.cont [3/16] %v197, 128
        %214 = vxpose.xlu0.b32.cont [4/16] %v198, 128
        %215 = vxpose.xlu0.b32.cont [5/16] %v199, 128
        %216 = vxpose.xlu0.b32.cont [6/16] %v200, 128
        %217 = vxpose.xlu0.b32.cont [7/16] %v201, 128
        %218 = vxpose.xlu0.b32.cont [8/16] %v202, 128
        %219 = vxpose.xlu0.b32.cont [9/16] %v203, 128
        %220 = vxpose.xlu0.b32.cont [10/16] %v204, 128
        %221 = vxpose.xlu0.b32.cont [11/16] %v205, 128
        %222 = vxpose.xlu0.b32.cont [12/16] %v206, 128
        %223 = vxpose.xlu0.b32.cont [13/16] %v207, 128
        %224 = vxpose.xlu0.b32.cont [14/16] %v208, 128
        %225 = vxpose.xlu0.b32.cont [15/16] %v209, 128
        %226 = vxpose.xlu0.b32.end [16/16] %v210, 128
        %v227 = vpop.trf.xlu0
        %v228 = vpop.trf.xlu0
        %v229 = vpop.trf.xlu0
        %v230 = vpop.trf.xlu0
        %v231 = vpop.trf.xlu0
        %v232 = vpop.trf.xlu0
        %v233 = vpop.trf.xlu0
        %v234 = vpop.trf.xlu0
        %v235 = vpop.trf.xlu0
        %v236 = vpop.trf.xlu0
        %v237 = vpop.trf.xlu0
        %v238 = vpop.trf.xlu0
        %v239 = vpop.trf.xlu0
        %v240 = vpop.trf.xlu0
        %v241 = vpop.trf.xlu0
        %v242 = vpop.trf.xlu0
        %v243 = vlaneseq
        %v244 = vshrl.u32 %v243, 7
        %v245 = vadd.s32 %v244, 8
        %v246 = vadd.s32 %v244, 16
        %v247 = vadd.s32 %v244, 24
        %v248 = vadd.s32 %v244, 32
        %v249 = vadd.s32 %v244, 40
        %v250 = vadd.s32 %v244, 48
        %v251 = vadd.s32 %v244, 56
        %v252 = vadd.s32 %v244, 64
        %v253 = vadd.s32 %v244, 72
        %v254 = vadd.s32 %v244, 80
        %v255 = vadd.s32 %v244, 88
        %v256 = vadd.s32 %v244, 96
        %v257 = vadd.s32 %v244, 104
        %v258 = vadd.s32 %v244, 112
        %v259 = vadd.s32 %v244, 120
        %vm260 = vcmp.lt.s32.totalorder %v244, 128
        %vm261 = vcmp.lt.s32.totalorder %v245, 128
        %vm262 = vcmp.lt.s32.totalorder %v246, 128
        %vm263 = vcmp.lt.s32.totalorder %v247, 128
        %vm264 = vcmp.lt.s32.totalorder %v248, 128
        %vm265 = vcmp.lt.s32.totalorder %v249, 128
        %vm266 = vcmp.lt.s32.totalorder %v250, 128
        %vm267 = vcmp.lt.s32.totalorder %v251, 128
        %vm268 = vcmp.lt.s32.totalorder %v252, 128
        %vm269 = vcmp.lt.s32.totalorder %v253, 128
        %vm270 = vcmp.lt.s32.totalorder %v254, 128
        %vm271 = vcmp.lt.s32.totalorder %v255, 128
        %vm272 = vcmp.lt.s32.totalorder %v256, 128
        %vm273 = vcmp.lt.s32.totalorder %v257, 128
        %vm274 = vcmp.lt.s32.totalorder %v258, 128
        %vm275 = vcmp.lt.s32.totalorder %v259, 128
        %v276 = vsel %vm260, 1, 0
        %v277 = vsel %vm261, 1, 0
        %v278 = vsel %vm262, 1, 0
        %v279 = vsel %vm263, 1, 0
        %v280 = vsel %vm264, 1, 0
        %v281 = vsel %vm265, 1, 0
        %v282 = vsel %vm266, 1, 0
        %v283 = vsel %vm267, 1, 0
        %v284 = vsel %vm268, 1, 0
        %v285 = vsel %vm269, 1, 0
        %v286 = vsel %vm270, 1, 0
        %v287 = vsel %vm271, 1, 0
        %v288 = vsel %vm272, 1, 0
        %v289 = vsel %vm273, 1, 0
        %v290 = vsel %vm274, 1, 0
        %v291 = vsel %vm275, 1, 0
        %v292 = vcvt.s32.f32 %v276
        %v293 = vcvt.s32.f32 %v277
        %v294 = vcvt.s32.f32 %v278
        %v295 = vcvt.s32.f32 %v279
        %v296 = vcvt.s32.f32 %v280
        %v297 = vcvt.s32.f32 %v281
        %v298 = vcvt.s32.f32 %v282
        %v299 = vcvt.s32.f32 %v283
        %v300 = vcvt.s32.f32 %v284
        %v301 = vcvt.s32.f32 %v285
        %v302 = vcvt.s32.f32 %v286
        %v303 = vcvt.s32.f32 %v287
        %v304 = vcvt.s32.f32 %v288
        %v305 = vcvt.s32.f32 %v289
        %v306 = vcvt.s32.f32 %v290
        %v307 = vcvt.s32.f32 %v291
        %v308 = vand.u32 %v307, 4294901760
        %309 = vmatpush.msra.mxu0 %v308
        %v310 = vand.u32 %v306, 4294901760
        %311 = vmatpush.msra.mxu0 %v310
        %v312 = vand.u32 %v305, 4294901760
        %313 = vmatpush.msra.mxu0 %v312
        %v314 = vand.u32 %v304, 4294901760
        %315 = vmatpush.msra.mxu0 %v314
        %v316 = vand.u32 %v303, 4294901760
        %317 = vmatpush.msra.mxu0 %v316
        %v318 = vand.u32 %v302, 4294901760
        %319 = vmatpush.msra.mxu0 %v318
        %v320 = vand.u32 %v301, 4294901760
        %321 = vmatpush.msra.mxu0 %v320
        %v322 = vand.u32 %v300, 4294901760
        %323 = vmatpush.msra.mxu0 %v322
        %v324 = vand.u32 %v299, 4294901760
        %325 = vmatpush.msra.mxu0 %v324
        %v326 = vand.u32 %v298, 4294901760
        %327 = vmatpush.msra.mxu0 %v326
        %v328 = vand.u32 %v297, 4294901760
        %329 = vmatpush.msra.mxu0 %v328
        %v330 = vand.u32 %v296, 4294901760
        %331 = vmatpush.msra.mxu0 %v330
        %v332 = vand.u32 %v295, 4294901760
        %333 = vmatpush.msra.mxu0 %v332
        %v334 = vand.u32 %v294, 4294901760
        %335 = vmatpush.msra.mxu0 %v334
        %v336 = vand.u32 %v293, 4294901760
        %337 = vmatpush.msra.mxu0 %v336
        %v338 = vand.u32 %v292, 4294901760
        %339 = vmatpush.msra.mxu0 %v338
        %v340 = vand.u32 %v227, 4294901760
        %v341 = vsub.f32 %v227, %v340
        %v342 = vand.u32 %v341, 4294901760
        %v343 = vsub.f32 %v341, %v342
        %v344 = vand.u32 %v343, 4294901760
        %345 = vmatmul.f32.gmra.mxu0 %v344
        %v346 = vpop.f32.mrf.mxu0
        %v347 = vadd.f32 0.0, %v346
        %v348 = vand.u32 %v228, 4294901760
        %v349 = vsub.f32 %v228, %v348
        %v350 = vand.u32 %v349, 4294901760
        %v351 = vsub.f32 %v349, %v350
        %v352 = vand.u32 %v351, 4294901760
        %353 = vmatmul.f32.gmra.mxu0 %v352
        %v354 = vpop.f32.mrf.mxu0
        %v355 = vadd.f32 0.0, %v354
        %v356 = vand.u32 %v229, 4294901760
        %v357 = vsub.f32 %v229, %v356
        %v358 = vand.u32 %v357, 4294901760
        %v359 = vsub.f32 %v357, %v358
        %v360 = vand.u32 %v359, 4294901760
        %361 = vmatmul.f32.gmra.mxu0 %v360
        %v362 = vpop.f32.mrf.mxu0
        %v363 = vadd.f32 0.0, %v362
        %v364 = vand.u32 %v230, 4294901760
        %v365 = vsub.f32 %v230, %v364
        %v366 = vand.u32 %v365, 4294901760
        %v367 = vsub.f32 %v365, %v366
        %v368 = vand.u32 %v367, 4294901760
        %369 = vmatmul.f32.gmra.mxu0 %v368
        %v370 = vpop.f32.mrf.mxu0
        %v371 = vadd.f32 0.0, %v370
        %v372 = vand.u32 %v231, 4294901760
        %v373 = vsub.f32 %v231, %v372
        %v374 = vand.u32 %v373, 4294901760
        %v375 = vsub.f32 %v373, %v374
        %v376 = vand.u32 %v375, 4294901760
        %377 = vmatmul.f32.gmra.mxu0 %v376
        %v378 = vpop.f32.mrf.mxu0
        %v379 = vadd.f32 0.0, %v378
        %v380 = vand.u32 %v232, 4294901760
        %v381 = vsub.f32 %v232, %v380
        %v382 = vand.u32 %v381, 4294901760
        %v383 = vsub.f32 %v381, %v382
        %v384 = vand.u32 %v383, 4294901760
        %385 = vmatmul.f32.gmra.mxu0 %v384
        %v386 = vpop.f32.mrf.mxu0
        %v387 = vadd.f32 0.0, %v386
        %v388 = vand.u32 %v233, 4294901760
        %v389 = vsub.f32 %v233, %v388
        %v390 = vand.u32 %v389, 4294901760
        %v391 = vsub.f32 %v389, %v390
        %v392 = vand.u32 %v391, 4294901760
        %393 = vmatmul.f32.gmra.mxu0 %v392
        %v394 = vpop.f32.mrf.mxu0
        %v395 = vadd.f32 0.0, %v394
        %v396 = vand.u32 %v234, 4294901760
        %v397 = vsub.f32 %v234, %v396
        %v398 = vand.u32 %v397, 4294901760
        %v399 = vsub.f32 %v397, %v398
        %v400 = vand.u32 %v399, 4294901760
        %401 = vmatmul.f32.gmra.mxu0 %v400
        %v402 = vpop.f32.mrf.mxu0
        %v403 = vadd.f32 0.0, %v402
        %v404 = vand.u32 %v235, 4294901760
        %v405 = vsub.f32 %v235, %v404
        %v406 = vand.u32 %v405, 4294901760
        %v407 = vsub.f32 %v405, %v406
        %v408 = vand.u32 %v407, 4294901760
        %409 = vmatmul.f32.gmra.mxu0 %v408
        %v410 = vpop.f32.mrf.mxu0
        %v411 = vadd.f32 0.0, %v410
        %v412 = vand.u32 %v236, 4294901760
        %v413 = vsub.f32 %v236, %v412
        %v414 = vand.u32 %v413, 4294901760
        %v415 = vsub.f32 %v413, %v414
        %v416 = vand.u32 %v415, 4294901760
        %417 = vmatmul.f32.gmra.mxu0 %v416
        %v418 = vpop.f32.mrf.mxu0
        %v419 = vadd.f32 0.0, %v418
        %v420 = vand.u32 %v237, 4294901760
        %v421 = vsub.f32 %v237, %v420
        %v422 = vand.u32 %v421, 4294901760
        %v423 = vsub.f32 %v421, %v422
        %v424 = vand.u32 %v423, 4294901760
        %425 = vmatmul.f32.gmra.mxu0 %v424
        %v426 = vpop.f32.mrf.mxu0
        %v427 = vadd.f32 0.0, %v426
        %v428 = vand.u32 %v238, 4294901760
        %v429 = vsub.f32 %v238, %v428
        %v430 = vand.u32 %v429, 4294901760
        %v431 = vsub.f32 %v429, %v430
        %v432 = vand.u32 %v431, 4294901760
        %433 = vmatmul.f32.gmra.mxu0 %v432
        %v434 = vpop.f32.mrf.mxu0
        %v435 = vadd.f32 0.0, %v434
        %436 = vdwg.mxu0
        %v437 = vand.u32 %v307, 4294901760
        %v438 = vsub.f32 %v307, %v437
        %v439 = vand.u32 %v438, 4294901760
        %v440 = vsub.f32 %v438, %v439
        %v441 = vand.u32 %v440, 4294901760
        %442 = vmatpush.msra.mxu0 %v441
        %v443 = vand.u32 %v306, 4294901760
        %v444 = vsub.f32 %v306, %v443
        %v445 = vand.u32 %v444, 4294901760
        %v446 = vsub.f32 %v444, %v445
        %v447 = vand.u32 %v446, 4294901760
        %448 = vmatpush.msra.mxu0 %v447
        %v449 = vand.u32 %v305, 4294901760
        %v450 = vsub.f32 %v305, %v449
        %v451 = vand.u32 %v450, 4294901760
        %v452 = vsub.f32 %v450, %v451
        %v453 = vand.u32 %v452, 4294901760
        %454 = vmatpush.msra.mxu0 %v453
        %v455 = vand.u32 %v304, 4294901760
        %v456 = vsub.f32 %v304, %v455
        %v457 = vand.u32 %v456, 4294901760
        %v458 = vsub.f32 %v456, %v457
        %v459 = vand.u32 %v458, 4294901760
        %460 = vmatpush.msra.mxu0 %v459
        %v461 = vand.u32 %v303, 4294901760
        %v462 = vsub.f32 %v303, %v461
        %v463 = vand.u32 %v462, 4294901760
        %v464 = vsub.f32 %v462, %v463
        %v465 = vand.u32 %v464, 4294901760
        %466 = vmatpush.msra.mxu0 %v465
        %v467 = vand.u32 %v302, 4294901760
        %v468 = vsub.f32 %v302, %v467
        %v469 = vand.u32 %v468, 4294901760
        %v470 = vsub.f32 %v468, %v469
        %v471 = vand.u32 %v470, 4294901760
        %472 = vmatpush.msra.mxu0 %v471
        %v473 = vand.u32 %v301, 4294901760
        %v474 = vsub.f32 %v301, %v473
        %v475 = vand.u32 %v474, 4294901760
        %v476 = vsub.f32 %v474, %v475
        %v477 = vand.u32 %v476, 4294901760
        %478 = vmatpush.msra.mxu0 %v477
        %v479 = vand.u32 %v300, 4294901760
        %v480 = vsub.f32 %v300, %v479
        %v481 = vand.u32 %v480, 4294901760
        %v482 = vsub.f32 %v480, %v481
        %v483 = vand.u32 %v482, 4294901760
        %484 = vmatpush.msra.mxu0 %v483
        %v485 = vand.u32 %v299, 4294901760
        %v486 = vsub.f32 %v299, %v485
        %v487 = vand.u32 %v486, 4294901760
        %v488 = vsub.f32 %v486, %v487
        %v489 = vand.u32 %v488, 4294901760
        %490 = vmatpush.msra.mxu0 %v489
        %v491 = vand.u32 %v298, 4294901760
        %v492 = vsub.f32 %v298, %v491
        %v493 = vand.u32 %v492, 4294901760
        %v494 = vsub.f32 %v492, %v493
        %v495 = vand.u32 %v494, 4294901760
        %496 = vmatpush.msra.mxu0 %v495
        %v497 = vand.u32 %v297, 4294901760
        %v498 = vsub.f32 %v297, %v497
        %v499 = vand.u32 %v498, 4294901760
        %v500 = vsub.f32 %v498, %v499
        %v501 = vand.u32 %v500, 4294901760
        %502 = vmatpush.msra.mxu0 %v501
        %v503 = vand.u32 %v296, 4294901760
        %v504 = vsub.f32 %v296, %v503
        %v505 = vand.u32 %v504, 4294901760
        %v506 = vsub.f32 %v504, %v505
        %v507 = vand.u32 %v506, 4294901760
        %508 = vmatpush.msra.mxu0 %v507
        %v509 = vand.u32 %v295, 4294901760
        %v510 = vsub.f32 %v295, %v509
        %v511 = vand.u32 %v510, 4294901760
        %v512 = vsub.f32 %v510, %v511
        %v513 = vand.u32 %v512, 4294901760
        %514 = vmatpush.msra.mxu0 %v513
        %v515 = vand.u32 %v294, 4294901760
        %v516 = vsub.f32 %v294, %v515
        %v517 = vand.u32 %v516, 4294901760
        %v518 = vsub.f32 %v516, %v517
        %v519 = vand.u32 %v518, 4294901760
        %520 = vmatpush.msra.mxu0 %v519
        %v521 = vand.u32 %v293, 4294901760
        %v522 = vsub.f32 %v293, %v521
        %v523 = vand.u32 %v522, 4294901760
        %v524 = vsub.f32 %v522, %v523
        %v525 = vand.u32 %v524, 4294901760
        %526 = vmatpush.msra.mxu0 %v525
        %v527 = vand.u32 %v292, 4294901760
        %v528 = vsub.f32 %v292, %v527
        %v529 = vand.u32 %v528, 4294901760
        %v530 = vsub.f32 %v528, %v529
        %v531 = vand.u32 %v530, 4294901760
        %532 = vmatpush.msra.mxu0 %v531
        %v533 = vand.u32 %v227, 4294901760
        %534 = vmatmul.f32.gmra.mxu0 %v533
        %v535 = vpop.f32.mrf.mxu0
        %v536 = vadd.f32 %v347, %v535
        %v537 = vand.u32 %v228, 4294901760
        %538 = vmatmul.f32.gmra.mxu0 %v537
        %v539 = vpop.f32.mrf.mxu0
        %v540 = vadd.f32 %v355, %v539
        %v541 = vand.u32 %v229, 4294901760
        %542 = vmatmul.f32.gmra.mxu0 %v541
        %v543 = vpop.f32.mrf.mxu0
        %v544 = vadd.f32 %v363, %v543
        %v545 = vand.u32 %v230, 4294901760
        %546 = vmatmul.f32.gmra.mxu0 %v545
        %v547 = vpop.f32.mrf.mxu0
        %v548 = vadd.f32 %v371, %v547
        %v549 = vand.u32 %v231, 4294901760
        %550 = vmatmul.f32.gmra.mxu0 %v549
        %v551 = vpop.f32.mrf.mxu0
        %v552 = vadd.f32 %v379, %v551
        %v553 = vand.u32 %v232, 4294901760
        %554 = vmatmul.f32.gmra.mxu0 %v553
        %v555 = vpop.f32.mrf.mxu0
        %v556 = vadd.f32 %v387, %v555
        %v557 = vand.u32 %v233, 4294901760
        %558 = vmatmul.f32.gmra.mxu0 %v557
        %v559 = vpop.f32.mrf.mxu0
        %v560 = vadd.f32 %v395, %v559
        %v561 = vand.u32 %v234, 4294901760
        %562 = vmatmul.f32.gmra.mxu0 %v561
        %v563 = vpop.f32.mrf.mxu0
        %v564 = vadd.f32 %v403, %v563
        %v565 = vand.u32 %v235, 4294901760
        %566 = vmatmul.f32.gmra.mxu0 %v565
        %v567 = vpop.f32.mrf.mxu0
        %v568 = vadd.f32 %v411, %v567
        %v569 = vand.u32 %v236, 4294901760
        %570 = vmatmul.f32.gmra.mxu0 %v569
        %v571 = vpop.f32.mrf.mxu0
        %v572 = vadd.f32 %v419, %v571
        %v573 = vand.u32 %v237, 4294901760
        %574 = vmatmul.f32.gmra.mxu0 %v573
        %v575 = vpop.f32.mrf.mxu0
        %v576 = vadd.f32 %v427, %v575
        %v577 = vand.u32 %v238, 4294901760
        %578 = vmatmul.f32.gmra.mxu0 %v577
        %v579 = vpop.f32.mrf.mxu0
        %v580 = vadd.f32 %v435, %v579
        %581 = vdwg.mxu0
        %v582 = vand.u32 %v307, 4294901760
        %v583 = vsub.f32 %v307, %v582
        %584 = vmatpush.msra.mxu0 %v583
        %v585 = vand.u32 %v306, 4294901760
        %v586 = vsub.f32 %v306, %v585
        %587 = vmatpush.msra.mxu0 %v586
        %v588 = vand.u32 %v305, 4294901760
        %v589 = vsub.f32 %v305, %v588
        %590 = vmatpush.msra.mxu0 %v589
        %v591 = vand.u32 %v304, 4294901760
        %v592 = vsub.f32 %v304, %v591
        %593 = vmatpush.msra.mxu0 %v592
        %v594 = vand.u32 %v303, 4294901760
        %v595 = vsub.f32 %v303, %v594
        %596 = vmatpush.msra.mxu0 %v595
        %v597 = vand.u32 %v302, 4294901760
        %v598 = vsub.f32 %v302, %v597
        %599 = vmatpush.msra.mxu0 %v598
        %v600 = vand.u32 %v301, 4294901760
        %v601 = vsub.f32 %v301, %v600
        %602 = vmatpush.msra.mxu0 %v601
        %v603 = vand.u32 %v300, 4294901760
        %v604 = vsub.f32 %v300, %v603
        %605 = vmatpush.msra.mxu0 %v604
        %v606 = vand.u32 %v299, 4294901760
        %v607 = vsub.f32 %v299, %v606
        %608 = vmatpush.msra.mxu0 %v607
        %v609 = vand.u32 %v298, 4294901760
        %v610 = vsub.f32 %v298, %v609
        %611 = vmatpush.msra.mxu0 %v610
        %v612 = vand.u32 %v297, 4294901760
        %v613 = vsub.f32 %v297, %v612
        %614 = vmatpush.msra.mxu0 %v613
        %v615 = vand.u32 %v296, 4294901760
        %v616 = vsub.f32 %v296, %v615
        %617 = vmatpush.msra.mxu0 %v616
        %v618 = vand.u32 %v295, 4294901760
        %v619 = vsub.f32 %v295, %v618
        %620 = vmatpush.msra.mxu0 %v619
        %v621 = vand.u32 %v294, 4294901760
        %v622 = vsub.f32 %v294, %v621
        %623 = vmatpush.msra.mxu0 %v622
        %v624 = vand.u32 %v293, 4294901760
        %v625 = vsub.f32 %v293, %v624
        %626 = vmatpush.msra.mxu0 %v625
        %v627 = vand.u32 %v292, 4294901760
        %v628 = vsub.f32 %v292, %v627
        %629 = vmatpush.msra.mxu0 %v628
        %v630 = vand.u32 %v227, 4294901760
        %v631 = vsub.f32 %v227, %v630
        %632 = vmatmul.f32.gmra.mxu0 %v631
        %v633 = vpop.f32.mrf.mxu0
        %v634 = vadd.f32 %v536, %v633
        %v635 = vand.u32 %v228, 4294901760
        %v636 = vsub.f32 %v228, %v635
        %637 = vmatmul.f32.gmra.mxu0 %v636
        %v638 = vpop.f32.mrf.mxu0
        %v639 = vadd.f32 %v540, %v638
        %v640 = vand.u32 %v229, 4294901760
        %v641 = vsub.f32 %v229, %v640
        %642 = vmatmul.f32.gmra.mxu0 %v641
        %v643 = vpop.f32.mrf.mxu0
        %v644 = vadd.f32 %v544, %v643
        %v645 = vand.u32 %v230, 4294901760
        %v646 = vsub.f32 %v230, %v645
        %647 = vmatmul.f32.gmra.mxu0 %v646
        %v648 = vpop.f32.mrf.mxu0
        %v649 = vadd.f32 %v548, %v648
        %v650 = vand.u32 %v231, 4294901760
        %v651 = vsub.f32 %v231, %v650
        %652 = vmatmul.f32.gmra.mxu0 %v651
        %v653 = vpop.f32.mrf.mxu0
        %v654 = vadd.f32 %v552, %v653
        %v655 = vand.u32 %v232, 4294901760
        %v656 = vsub.f32 %v232, %v655
        %657 = vmatmul.f32.gmra.mxu0 %v656
        %v658 = vpop.f32.mrf.mxu0
        %v659 = vadd.f32 %v556, %v658
        %v660 = vand.u32 %v233, 4294901760
        %v661 = vsub.f32 %v233, %v660
        %662 = vmatmul.f32.gmra.mxu0 %v661
        %v663 = vpop.f32.mrf.mxu0
        %v664 = vadd.f32 %v560, %v663
        %v665 = vand.u32 %v234, 4294901760
        %v666 = vsub.f32 %v234, %v665
        %667 = vmatmul.f32.gmra.mxu0 %v666
        %v668 = vpop.f32.mrf.mxu0
        %v669 = vadd.f32 %v564, %v668
        %v670 = vand.u32 %v235, 4294901760
        %v671 = vsub.f32 %v235, %v670
        %672 = vmatmul.f32.gmra.mxu0 %v671
        %v673 = vpop.f32.mrf.mxu0
        %v674 = vadd.f32 %v568, %v673
        %v675 = vand.u32 %v236, 4294901760
        %v676 = vsub.f32 %v236, %v675
        %677 = vmatmul.f32.gmra.mxu0 %v676
        %v678 = vpop.f32.mrf.mxu0
        %v679 = vadd.f32 %v572, %v678
        %v680 = vand.u32 %v237, 4294901760
        %v681 = vsub.f32 %v237, %v680
        %682 = vmatmul.f32.gmra.mxu0 %v681
        %v683 = vpop.f32.mrf.mxu0
        %v684 = vadd.f32 %v576, %v683
        %v685 = vand.u32 %v238, 4294901760
        %v686 = vsub.f32 %v238, %v685
        %687 = vmatmul.f32.gmra.mxu0 %v686
        %v688 = vpop.f32.mrf.mxu0
        %v689 = vadd.f32 %v580, %v688
        %690 = vdwg.mxu0
        %v691 = vand.u32 %v307, 4294901760
        %692 = vmatpush.msra.mxu0 %v691
        %v693 = vand.u32 %v306, 4294901760
        %694 = vmatpush.msra.mxu0 %v693
        %v695 = vand.u32 %v305, 4294901760
        %696 = vmatpush.msra.mxu0 %v695
        %v697 = vand.u32 %v304, 4294901760
        %698 = vmatpush.msra.mxu0 %v697
        %v699 = vand.u32 %v303, 4294901760
        %700 = vmatpush.msra.mxu0 %v699
        %v701 = vand.u32 %v302, 4294901760
        %702 = vmatpush.msra.mxu0 %v701
        %v703 = vand.u32 %v301, 4294901760
        %704 = vmatpush.msra.mxu0 %v703
        %v705 = vand.u32 %v300, 4294901760
        %706 = vmatpush.msra.mxu0 %v705
        %v707 = vand.u32 %v299, 4294901760
        %708 = vmatpush.msra.mxu0 %v707
        %v709 = vand.u32 %v298, 4294901760
        %710 = vmatpush.msra.mxu0 %v709
        %v711 = vand.u32 %v297, 4294901760
        %712 = vmatpush.msra.mxu0 %v711
        %v713 = vand.u32 %v296, 4294901760
        %714 = vmatpush.msra.mxu0 %v713
        %v715 = vand.u32 %v295, 4294901760
        %716 = vmatpush.msra.mxu0 %v715
        %v717 = vand.u32 %v294, 4294901760
        %718 = vmatpush.msra.mxu0 %v717
        %v719 = vand.u32 %v293, 4294901760
        %720 = vmatpush.msra.mxu0 %v719
        %v721 = vand.u32 %v292, 4294901760
        %722 = vmatpush.msra.mxu0 %v721
        %v723 = vand.u32 %v227, 4294901760
        %v724 = vsub.f32 %v227, %v723
        %v725 = vand.u32 %v724, 4294901760
        %726 = vmatmul.f32.gmra.mxu0 %v725
        %v727 = vpop.f32.mrf.mxu0
        %v728 = vadd.f32 %v634, %v727
        %v729 = vand.u32 %v228, 4294901760
        %v730 = vsub.f32 %v228, %v729
        %v731 = vand.u32 %v730, 4294901760
        %732 = vmatmul.f32.gmra.mxu0 %v731
        %v733 = vpop.f32.mrf.mxu0
        %v734 = vadd.f32 %v639, %v733
        %v735 = vand.u32 %v229, 4294901760
        %v736 = vsub.f32 %v229, %v735
        %v737 = vand.u32 %v736, 4294901760
        %738 = vmatmul.f32.gmra.mxu0 %v737
        %v739 = vpop.f32.mrf.mxu0
        %v740 = vadd.f32 %v644, %v739
        %v741 = vand.u32 %v230, 4294901760
        %v742 = vsub.f32 %v230, %v741
        %v743 = vand.u32 %v742, 4294901760
        %744 = vmatmul.f32.gmra.mxu0 %v743
        %v745 = vpop.f32.mrf.mxu0
        %v746 = vadd.f32 %v649, %v745
        %v747 = vand.u32 %v231, 4294901760
        %v748 = vsub.f32 %v231, %v747
        %v749 = vand.u32 %v748, 4294901760
        %750 = vmatmul.f32.gmra.mxu0 %v749
        %v751 = vpop.f32.mrf.mxu0
        %v752 = vadd.f32 %v654, %v751
        %v753 = vand.u32 %v232, 4294901760
        %v754 = vsub.f32 %v232, %v753
        %v755 = vand.u32 %v754, 4294901760
        %756 = vmatmul.f32.gmra.mxu0 %v755
        %v757 = vpop.f32.mrf.mxu0
        %v758 = vadd.f32 %v659, %v757
        %v759 = vand.u32 %v233, 4294901760
        %v760 = vsub.f32 %v233, %v759
        %v761 = vand.u32 %v760, 4294901760
        %762 = vmatmul.f32.gmra.mxu0 %v761
        %v763 = vpop.f32.mrf.mxu0
        %v764 = vadd.f32 %v664, %v763
        %v765 = vand.u32 %v234, 4294901760
        %v766 = vsub.f32 %v234, %v765
        %v767 = vand.u32 %v766, 4294901760
        %768 = vmatmul.f32.gmra.mxu0 %v767
        %v769 = vpop.f32.mrf.mxu0
        %v770 = vadd.f32 %v669, %v769
        %v771 = vand.u32 %v235, 4294901760
        %v772 = vsub.f32 %v235, %v771
        %v773 = vand.u32 %v772, 4294901760
        %774 = vmatmul.f32.gmra.mxu0 %v773
        %v775 = vpop.f32.mrf.mxu0
        %v776 = vadd.f32 %v674, %v775
        %v777 = vand.u32 %v236, 4294901760
        %v778 = vsub.f32 %v236, %v777
        %v779 = vand.u32 %v778, 4294901760
        %780 = vmatmul.f32.gmra.mxu0 %v779
        %v781 = vpop.f32.mrf.mxu0
        %v782 = vadd.f32 %v679, %v781
        %v783 = vand.u32 %v237, 4294901760
        %v784 = vsub.f32 %v237, %v783
        %v785 = vand.u32 %v784, 4294901760
        %786 = vmatmul.f32.gmra.mxu0 %v785
        %v787 = vpop.f32.mrf.mxu0
        %v788 = vadd.f32 %v684, %v787
        %v789 = vand.u32 %v238, 4294901760
        %v790 = vsub.f32 %v238, %v789
        %v791 = vand.u32 %v790, 4294901760
        %792 = vmatmul.f32.gmra.mxu0 %v791
        %v793 = vpop.f32.mrf.mxu0
        %v794 = vadd.f32 %v689, %v793
        %795 = vdwg.mxu0
        %v796 = vand.u32 %v307, 4294901760
        %v797 = vsub.f32 %v307, %v796
        %v798 = vand.u32 %v797, 4294901760
        %799 = vmatpush.msra.mxu0 %v798
        %v800 = vand.u32 %v306, 4294901760
        %v801 = vsub.f32 %v306, %v800
        %v802 = vand.u32 %v801, 4294901760
        %803 = vmatpush.msra.mxu0 %v802
        %v804 = vand.u32 %v305, 4294901760
        %v805 = vsub.f32 %v305, %v804
        %v806 = vand.u32 %v805, 4294901760
        %807 = vmatpush.msra.mxu0 %v806
        %v808 = vand.u32 %v304, 4294901760
        %v809 = vsub.f32 %v304, %v808
        %v810 = vand.u32 %v809, 4294901760
        %811 = vmatpush.msra.mxu0 %v810
        %v812 = vand.u32 %v303, 4294901760
        %v813 = vsub.f32 %v303, %v812
        %v814 = vand.u32 %v813, 4294901760
        %815 = vmatpush.msra.mxu0 %v814
        %v816 = vand.u32 %v302, 4294901760
        %v817 = vsub.f32 %v302, %v816
        %v818 = vand.u32 %v817, 4294901760
        %819 = vmatpush.msra.mxu0 %v818
        %v820 = vand.u32 %v301, 4294901760
        %v821 = vsub.f32 %v301, %v820
        %v822 = vand.u32 %v821, 4294901760
        %823 = vmatpush.msra.mxu0 %v822
        %v824 = vand.u32 %v300, 4294901760
        %v825 = vsub.f32 %v300, %v824
        %v826 = vand.u32 %v825, 4294901760
        %827 = vmatpush.msra.mxu0 %v826
        %v828 = vand.u32 %v299, 4294901760
        %v829 = vsub.f32 %v299, %v828
        %v830 = vand.u32 %v829, 4294901760
        %831 = vmatpush.msra.mxu0 %v830
        %v832 = vand.u32 %v298, 4294901760
        %v833 = vsub.f32 %v298, %v832
        %v834 = vand.u32 %v833, 4294901760
        %835 = vmatpush.msra.mxu0 %v834
        %v836 = vand.u32 %v297, 4294901760
        %v837 = vsub.f32 %v297, %v836
        %v838 = vand.u32 %v837, 4294901760
        %839 = vmatpush.msra.mxu0 %v838
        %v840 = vand.u32 %v296, 4294901760
        %v841 = vsub.f32 %v296, %v840
        %v842 = vand.u32 %v841, 4294901760
        %843 = vmatpush.msra.mxu0 %v842
        %v844 = vand.u32 %v295, 4294901760
        %v845 = vsub.f32 %v295, %v844
        %v846 = vand.u32 %v845, 4294901760
        %847 = vmatpush.msra.mxu0 %v846
        %v848 = vand.u32 %v294, 4294901760
        %v849 = vsub.f32 %v294, %v848
        %v850 = vand.u32 %v849, 4294901760
        %851 = vmatpush.msra.mxu0 %v850
        %v852 = vand.u32 %v293, 4294901760
        %v853 = vsub.f32 %v293, %v852
        %v854 = vand.u32 %v853, 4294901760
        %855 = vmatpush.msra.mxu0 %v854
        %v856 = vand.u32 %v292, 4294901760
        %v857 = vsub.f32 %v292, %v856
        %v858 = vand.u32 %v857, 4294901760
        %859 = vmatpush.msra.mxu0 %v858
        %v860 = vand.u32 %v227, 4294901760
        %861 = vmatmul.f32.gmra.mxu0 %v860
        %v862 = vpop.f32.mrf.mxu0
        %v863 = vadd.f32 %v728, %v862
        %v864 = vand.u32 %v228, 4294901760
        %865 = vmatmul.f32.gmra.mxu0 %v864
        %v866 = vpop.f32.mrf.mxu0
        %v867 = vadd.f32 %v734, %v866
        %v868 = vand.u32 %v229, 4294901760
        %869 = vmatmul.f32.gmra.mxu0 %v868
        %v870 = vpop.f32.mrf.mxu0
        %v871 = vadd.f32 %v740, %v870
        %v872 = vand.u32 %v230, 4294901760
        %873 = vmatmul.f32.gmra.mxu0 %v872
        %v874 = vpop.f32.mrf.mxu0
        %v875 = vadd.f32 %v746, %v874
        %v876 = vand.u32 %v231, 4294901760
        %877 = vmatmul.f32.gmra.mxu0 %v876
        %v878 = vpop.f32.mrf.mxu0
        %v879 = vadd.f32 %v752, %v878
        %v880 = vand.u32 %v232, 4294901760
        %881 = vmatmul.f32.gmra.mxu0 %v880
        %v882 = vpop.f32.mrf.mxu0
        %v883 = vadd.f32 %v758, %v882
        %v884 = vand.u32 %v233, 4294901760
        %885 = vmatmul.f32.gmra.mxu0 %v884
        %v886 = vpop.f32.mrf.mxu0
        %v887 = vadd.f32 %v764, %v886
        %v888 = vand.u32 %v234, 4294901760
        %889 = vmatmul.f32.gmra.mxu0 %v888
        %v890 = vpop.f32.mrf.mxu0
        %v891 = vadd.f32 %v770, %v890
        %v892 = vand.u32 %v235, 4294901760
        %893 = vmatmul.f32.gmra.mxu0 %v892
        %v894 = vpop.f32.mrf.mxu0
        %v895 = vadd.f32 %v776, %v894
        %v896 = vand.u32 %v236, 4294901760
        %897 = vmatmul.f32.gmra.mxu0 %v896
        %v898 = vpop.f32.mrf.mxu0
        %v899 = vadd.f32 %v782, %v898
        %v900 = vand.u32 %v237, 4294901760
        %901 = vmatmul.f32.gmra.mxu0 %v900
        %v902 = vpop.f32.mrf.mxu0
        %v903 = vadd.f32 %v788, %v902
        %v904 = vand.u32 %v238, 4294901760
        %905 = vmatmul.f32.gmra.mxu0 %v904
        %v906 = vpop.f32.mrf.mxu0
        %v907 = vadd.f32 %v794, %v906
        %908 = vdwg.mxu0
        %v909 = vand.u32 %v307, 4294901760
        %910 = vmatpush.msra.mxu0 %v909
        %v911 = vand.u32 %v306, 4294901760
        %912 = vmatpush.msra.mxu0 %v911
        %v913 = vand.u32 %v305, 4294901760
        %914 = vmatpush.msra.mxu0 %v913
        %v915 = vand.u32 %v304, 4294901760
        %916 = vmatpush.msra.mxu0 %v915
        %v917 = vand.u32 %v303, 4294901760
        %918 = vmatpush.msra.mxu0 %v917
        %v919 = vand.u32 %v302, 4294901760
        %920 = vmatpush.msra.mxu0 %v919
        %v921 = vand.u32 %v301, 4294901760
        %922 = vmatpush.msra.mxu0 %v921
        %v923 = vand.u32 %v300, 4294901760
        %924 = vmatpush.msra.mxu0 %v923
        %v925 = vand.u32 %v299, 4294901760
        %926 = vmatpush.msra.mxu0 %v925
        %v927 = vand.u32 %v298, 4294901760
        %928 = vmatpush.msra.mxu0 %v927
        %v929 = vand.u32 %v297, 4294901760
        %930 = vmatpush.msra.mxu0 %v929
        %v931 = vand.u32 %v296, 4294901760
        %932 = vmatpush.msra.mxu0 %v931
        %v933 = vand.u32 %v295, 4294901760
        %934 = vmatpush.msra.mxu0 %v933
        %v935 = vand.u32 %v294, 4294901760
        %936 = vmatpush.msra.mxu0 %v935
        %v937 = vand.u32 %v293, 4294901760
        %938 = vmatpush.msra.mxu0 %v937
        %v939 = vand.u32 %v292, 4294901760
        %940 = vmatpush.msra.mxu0 %v939
        %v941 = vand.u32 %v227, 4294901760
        %942 = vmatmul.f32.gmra.mxu0 %v941
        %v943 = vpop.f32.mrf.mxu0
        %v944 = vadd.f32 %v863, %v943
        %v945 = vand.u32 %v228, 4294901760
        %946 = vmatmul.f32.gmra.mxu0 %v945
        %v947 = vpop.f32.mrf.mxu0
        %v948 = vadd.f32 %v867, %v947
        %v949 = vand.u32 %v229, 4294901760
        %950 = vmatmul.f32.gmra.mxu0 %v949
        %v951 = vpop.f32.mrf.mxu0
        %v952 = vadd.f32 %v871, %v951
        %v953 = vand.u32 %v230, 4294901760
        %954 = vmatmul.f32.gmra.mxu0 %v953
        %v955 = vpop.f32.mrf.mxu0
        %v956 = vadd.f32 %v875, %v955
        %v957 = vand.u32 %v231, 4294901760
        %958 = vmatmul.f32.gmra.mxu0 %v957
        %v959 = vpop.f32.mrf.mxu0
        %v960 = vadd.f32 %v879, %v959
        %v961 = vand.u32 %v232, 4294901760
        %962 = vmatmul.f32.gmra.mxu0 %v961
        %v963 = vpop.f32.mrf.mxu0
        %v964 = vadd.f32 %v883, %v963
        %v965 = vand.u32 %v233, 4294901760
        %966 = vmatmul.f32.gmra.mxu0 %v965
        %v967 = vpop.f32.mrf.mxu0
        %v968 = vadd.f32 %v887, %v967
        %v969 = vand.u32 %v234, 4294901760
        %970 = vmatmul.f32.gmra.mxu0 %v969
        %v971 = vpop.f32.mrf.mxu0
        %v972 = vadd.f32 %v891, %v971
        %v973 = vand.u32 %v235, 4294901760
        %974 = vmatmul.f32.gmra.mxu0 %v973
        %v975 = vpop.f32.mrf.mxu0
        %v976 = vadd.f32 %v895, %v975
        %v977 = vand.u32 %v236, 4294901760
        %978 = vmatmul.f32.gmra.mxu0 %v977
        %v979 = vpop.f32.mrf.mxu0
        %v980 = vadd.f32 %v899, %v979
        %v981 = vand.u32 %v237, 4294901760
        %982 = vmatmul.f32.gmra.mxu0 %v981
        %v983 = vpop.f32.mrf.mxu0
        %v984 = vadd.f32 %v903, %v983
        %v985 = vand.u32 %v238, 4294901760
        %986 = vmatmul.f32.gmra.mxu0 %v985
        %v987 = vpop.f32.mrf.mxu0
        %v988 = vadd.f32 %v907, %v987
        %989 = vdwg.mxu0
        %v990 = vmul.f32 %v944, 0.0078125
        %v991 = vmul.f32 %v948, 0.0078125
        %v992 = vmul.f32 %v952, 0.0078125
        %v993 = vmul.f32 %v956, 0.0078125
        %v994 = vmul.f32 %v960, 0.0078125
        %v995 = vmul.f32 %v964, 0.0078125
        %v996 = vmul.f32 %v968, 0.0078125
        %v997 = vmul.f32 %v972, 0.0078125
        %v998 = vmul.f32 %v976, 0.0078125
        %v999 = vmul.f32 %v980, 0.0078125
        %v1000 = vmul.f32 %v984, 0.0078125
        %v1001 = vmul.f32 %v988, 0.0078125
        %1003 = vset.pattern.permute.xlu0 0
        %1004 = vperm.xlu0 %1003, %v990
        %v1005 = vpop.permute.xlu0 %1004
        %1008 = vset.pattern.permute.xlu0 0
        %1009 = vperm.xlu0 %1008, %v991
        %v1010 = vpop.permute.xlu0 %1009
        %1013 = vset.pattern.permute.xlu0 0
        %1014 = vperm.xlu0 %1013, %v992
        %v1015 = vpop.permute.xlu0 %1014
        %1018 = vset.pattern.permute.xlu0 0
        %1019 = vperm.xlu0 %1018, %v993
        %v1020 = vpop.permute.xlu0 %1019
        %1023 = vset.pattern.permute.xlu0 0
        %1024 = vperm.xlu0 %1023, %v994
        %v1025 = vpop.permute.xlu0 %1024
        %1028 = vset.pattern.permute.xlu0 0
        %1029 = vperm.xlu0 %1028, %v995
        %v1030 = vpop.permute.xlu0 %1029
        %1033 = vset.pattern.permute.xlu0 0
        %1034 = vperm.xlu0 %1033, %v996
        %v1035 = vpop.permute.xlu0 %1034
        %1038 = vset.pattern.permute.xlu0 0
        %1039 = vperm.xlu0 %1038, %v997
        %v1040 = vpop.permute.xlu0 %1039
        %1043 = vset.pattern.permute.xlu0 0
        %1044 = vperm.xlu0 %1043, %v998
        %v1045 = vpop.permute.xlu0 %1044
        %1048 = vset.pattern.permute.xlu0 0
        %1049 = vperm.xlu0 %1048, %v999
        %v1050 = vpop.permute.xlu0 %1049
        %1053 = vset.pattern.permute.xlu0 0
        %1054 = vperm.xlu0 %1053, %v1000
        %v1055 = vpop.permute.xlu0 %1054
        %1058 = vset.pattern.permute.xlu0 0
        %1059 = vperm.xlu0 %1058, %v1001
        %v1060 = vpop.permute.xlu0 %1059
        %v1062 = vsub.f32 %v227, %v1005
        %v1063 = vsub.f32 %v228, %v1010
        %v1064 = vsub.f32 %v229, %v1015
        %v1065 = vsub.f32 %v230, %v1020
        %v1066 = vsub.f32 %v231, %v1025
        %v1067 = vsub.f32 %v232, %v1030
        %v1068 = vsub.f32 %v233, %v1035
        %v1069 = vsub.f32 %v234, %v1040
        %v1070 = vsub.f32 %v235, %v1045
        %v1071 = vsub.f32 %v236, %v1050
        %v1072 = vsub.f32 %v237, %v1055
        %v1073 = vsub.f32 %v238, %v1060
        %v1074 = vmul.f32 %v1062, %v1062
        %v1075 = vmul.f32 %v1063, %v1063
        %v1076 = vmul.f32 %v1064, %v1064
        %v1077 = vmul.f32 %v1065, %v1065
        %v1078 = vmul.f32 %v1066, %v1066
        %v1079 = vmul.f32 %v1067, %v1067
        %v1080 = vmul.f32 %v1068, %v1068
        %v1081 = vmul.f32 %v1069, %v1069
        %v1082 = vmul.f32 %v1070, %v1070
        %v1083 = vmul.f32 %v1071, %v1071
        %v1084 = vmul.f32 %v1072, %v1072
        %v1085 = vmul.f32 %v1073, %v1073
        %v1086 = vand.u32 %v307, 4294901760
        %1087 = vmatpush.msra.mxu0 %v1086
        %v1088 = vand.u32 %v306, 4294901760
        %1089 = vmatpush.msra.mxu0 %v1088
        %v1090 = vand.u32 %v305, 4294901760
        %1091 = vmatpush.msra.mxu0 %v1090
        %v1092 = vand.u32 %v304, 4294901760
        %1093 = vmatpush.msra.mxu0 %v1092
        %v1094 = vand.u32 %v303, 4294901760
        %1095 = vmatpush.msra.mxu0 %v1094
        %v1096 = vand.u32 %v302, 4294901760
        %1097 = vmatpush.msra.mxu0 %v1096
        %v1098 = vand.u32 %v301, 4294901760
        %1099 = vmatpush.msra.mxu0 %v1098
        %v1100 = vand.u32 %v300, 4294901760
        %1101 = vmatpush.msra.mxu0 %v1100
        %v1102 = vand.u32 %v299, 4294901760
        %1103 = vmatpush.msra.mxu0 %v1102
        %v1104 = vand.u32 %v298, 4294901760
        %1105 = vmatpush.msra.mxu0 %v1104
        %v1106 = vand.u32 %v297, 4294901760
        %1107 = vmatpush.msra.mxu0 %v1106
        %v1108 = vand.u32 %v296, 4294901760
        %1109 = vmatpush.msra.mxu0 %v1108
        %v1110 = vand.u32 %v295, 4294901760
        %1111 = vmatpush.msra.mxu0 %v1110
        %v1112 = vand.u32 %v294, 4294901760
        %1113 = vmatpush.msra.mxu0 %v1112
        %v1114 = vand.u32 %v293, 4294901760
        %1115 = vmatpush.msra.mxu0 %v1114
        %v1116 = vand.u32 %v292, 4294901760
        %1117 = vmatpush.msra.mxu0 %v1116
        %v1118 = vand.u32 %v1074, 4294901760
        %v1119 = vsub.f32 %v1074, %v1118
        %v1120 = vand.u32 %v1119, 4294901760
        %v1121 = vsub.f32 %v1119, %v1120
        %v1122 = vand.u32 %v1121, 4294901760
        %1123 = vmatmul.f32.gmra.mxu0 %v1122
        %v1124 = vpop.f32.mrf.mxu0
        %v1125 = vadd.f32 0.0, %v1124
        %v1126 = vand.u32 %v1075, 4294901760
        %v1127 = vsub.f32 %v1075, %v1126
        %v1128 = vand.u32 %v1127, 4294901760
        %v1129 = vsub.f32 %v1127, %v1128
        %v1130 = vand.u32 %v1129, 4294901760
        %1131 = vmatmul.f32.gmra.mxu0 %v1130
        %v1132 = vpop.f32.mrf.mxu0
        %v1133 = vadd.f32 0.0, %v1132
        %v1134 = vand.u32 %v1076, 4294901760
        %v1135 = vsub.f32 %v1076, %v1134
        %v1136 = vand.u32 %v1135, 4294901760
        %v1137 = vsub.f32 %v1135, %v1136
        %v1138 = vand.u32 %v1137, 4294901760
        %1139 = vmatmul.f32.gmra.mxu0 %v1138
        %v1140 = vpop.f32.mrf.mxu0
        %v1141 = vadd.f32 0.0, %v1140
        %v1142 = vand.u32 %v1077, 4294901760
        %v1143 = vsub.f32 %v1077, %v1142
        %v1144 = vand.u32 %v1143, 4294901760
        %v1145 = vsub.f32 %v1143, %v1144
        %v1146 = vand.u32 %v1145, 4294901760
        %1147 = vmatmul.f32.gmra.mxu0 %v1146
        %v1148 = vpop.f32.mrf.mxu0
        %v1149 = vadd.f32 0.0, %v1148
        %v1150 = vand.u32 %v1078, 4294901760
        %v1151 = vsub.f32 %v1078, %v1150
        %v1152 = vand.u32 %v1151, 4294901760
        %v1153 = vsub.f32 %v1151, %v1152
        %v1154 = vand.u32 %v1153, 4294901760
        %1155 = vmatmul.f32.gmra.mxu0 %v1154
        %v1156 = vpop.f32.mrf.mxu0
        %v1157 = vadd.f32 0.0, %v1156
        %v1158 = vand.u32 %v1079, 4294901760
        %v1159 = vsub.f32 %v1079, %v1158
        %v1160 = vand.u32 %v1159, 4294901760
        %v1161 = vsub.f32 %v1159, %v1160
        %v1162 = vand.u32 %v1161, 4294901760
        %1163 = vmatmul.f32.gmra.mxu0 %v1162
        %v1164 = vpop.f32.mrf.mxu0
        %v1165 = vadd.f32 0.0, %v1164
        %v1166 = vand.u32 %v1080, 4294901760
        %v1167 = vsub.f32 %v1080, %v1166
        %v1168 = vand.u32 %v1167, 4294901760
        %v1169 = vsub.f32 %v1167, %v1168
        %v1170 = vand.u32 %v1169, 4294901760
        %1171 = vmatmul.f32.gmra.mxu0 %v1170
        %v1172 = vpop.f32.mrf.mxu0
        %v1173 = vadd.f32 0.0, %v1172
        %v1174 = vand.u32 %v1081, 4294901760
        %v1175 = vsub.f32 %v1081, %v1174
        %v1176 = vand.u32 %v1175, 4294901760
        %v1177 = vsub.f32 %v1175, %v1176
        %v1178 = vand.u32 %v1177, 4294901760
        %1179 = vmatmul.f32.gmra.mxu0 %v1178
        %v1180 = vpop.f32.mrf.mxu0
        %v1181 = vadd.f32 0.0, %v1180
        %v1182 = vand.u32 %v1082, 4294901760
        %v1183 = vsub.f32 %v1082, %v1182
        %v1184 = vand.u32 %v1183, 4294901760
        %v1185 = vsub.f32 %v1183, %v1184
        %v1186 = vand.u32 %v1185, 4294901760
        %1187 = vmatmul.f32.gmra.mxu0 %v1186
        %v1188 = vpop.f32.mrf.mxu0
        %v1189 = vadd.f32 0.0, %v1188
        %v1190 = vand.u32 %v1083, 4294901760
        %v1191 = vsub.f32 %v1083, %v1190
        %v1192 = vand.u32 %v1191, 4294901760
        %v1193 = vsub.f32 %v1191, %v1192
        %v1194 = vand.u32 %v1193, 4294901760
        %1195 = vmatmul.f32.gmra.mxu0 %v1194
        %v1196 = vpop.f32.mrf.mxu0
        %v1197 = vadd.f32 0.0, %v1196
        %v1198 = vand.u32 %v1084, 4294901760
        %v1199 = vsub.f32 %v1084, %v1198
        %v1200 = vand.u32 %v1199, 4294901760
        %v1201 = vsub.f32 %v1199, %v1200
        %v1202 = vand.u32 %v1201, 4294901760
        %1203 = vmatmul.f32.gmra.mxu0 %v1202
        %v1204 = vpop.f32.mrf.mxu0
        %v1205 = vadd.f32 0.0, %v1204
        %v1206 = vand.u32 %v1085, 4294901760
        %v1207 = vsub.f32 %v1085, %v1206
        %v1208 = vand.u32 %v1207, 4294901760
        %v1209 = vsub.f32 %v1207, %v1208
        %v1210 = vand.u32 %v1209, 4294901760
        %1211 = vmatmul.f32.gmra.mxu0 %v1210
        %v1212 = vpop.f32.mrf.mxu0
        %v1213 = vadd.f32 0.0, %v1212
        %1214 = vdwg.mxu0
        %v1215 = vand.u32 %v307, 4294901760
        %v1216 = vsub.f32 %v307, %v1215
        %v1217 = vand.u32 %v1216, 4294901760
        %v1218 = vsub.f32 %v1216, %v1217
        %v1219 = vand.u32 %v1218, 4294901760
        %1220 = vmatpush.msra.mxu0 %v1219
        %v1221 = vand.u32 %v306, 4294901760
        %v1222 = vsub.f32 %v306, %v1221
        %v1223 = vand.u32 %v1222, 4294901760
        %v1224 = vsub.f32 %v1222, %v1223
        %v1225 = vand.u32 %v1224, 4294901760
        %1226 = vmatpush.msra.mxu0 %v1225
        %v1227 = vand.u32 %v305, 4294901760
        %v1228 = vsub.f32 %v305, %v1227
        %v1229 = vand.u32 %v1228, 4294901760
        %v1230 = vsub.f32 %v1228, %v1229
        %v1231 = vand.u32 %v1230, 4294901760
        %1232 = vmatpush.msra.mxu0 %v1231
        %v1233 = vand.u32 %v304, 4294901760
        %v1234 = vsub.f32 %v304, %v1233
        %v1235 = vand.u32 %v1234, 4294901760
        %v1236 = vsub.f32 %v1234, %v1235
        %v1237 = vand.u32 %v1236, 4294901760
        %1238 = vmatpush.msra.mxu0 %v1237
        %v1239 = vand.u32 %v303, 4294901760
        %v1240 = vsub.f32 %v303, %v1239
        %v1241 = vand.u32 %v1240, 4294901760
        %v1242 = vsub.f32 %v1240, %v1241
        %v1243 = vand.u32 %v1242, 4294901760
        %1244 = vmatpush.msra.mxu0 %v1243
        %v1245 = vand.u32 %v302, 4294901760
        %v1246 = vsub.f32 %v302, %v1245
        %v1247 = vand.u32 %v1246, 4294901760
        %v1248 = vsub.f32 %v1246, %v1247
        %v1249 = vand.u32 %v1248, 4294901760
        %1250 = vmatpush.msra.mxu0 %v1249
        %v1251 = vand.u32 %v301, 4294901760
        %v1252 = vsub.f32 %v301, %v1251
        %v1253 = vand.u32 %v1252, 4294901760
        %v1254 = vsub.f32 %v1252, %v1253
        %v1255 = vand.u32 %v1254, 4294901760
        %1256 = vmatpush.msra.mxu0 %v1255
        %v1257 = vand.u32 %v300, 4294901760
        %v1258 = vsub.f32 %v300, %v1257
        %v1259 = vand.u32 %v1258, 4294901760
        %v1260 = vsub.f32 %v1258, %v1259
        %v1261 = vand.u32 %v1260, 4294901760
        %1262 = vmatpush.msra.mxu0 %v1261
        %v1263 = vand.u32 %v299, 4294901760
        %v1264 = vsub.f32 %v299, %v1263
        %v1265 = vand.u32 %v1264, 4294901760
        %v1266 = vsub.f32 %v1264, %v1265
        %v1267 = vand.u32 %v1266, 4294901760
        %1268 = vmatpush.msra.mxu0 %v1267
        %v1269 = vand.u32 %v298, 4294901760
        %v1270 = vsub.f32 %v298, %v1269
        %v1271 = vand.u32 %v1270, 4294901760
        %v1272 = vsub.f32 %v1270, %v1271
        %v1273 = vand.u32 %v1272, 4294901760
        %1274 = vmatpush.msra.mxu0 %v1273
        %v1275 = vand.u32 %v297, 4294901760
        %v1276 = vsub.f32 %v297, %v1275
        %v1277 = vand.u32 %v1276, 4294901760
        %v1278 = vsub.f32 %v1276, %v1277
        %v1279 = vand.u32 %v1278, 4294901760
        %1280 = vmatpush.msra.mxu0 %v1279
        %v1281 = vand.u32 %v296, 4294901760
        %v1282 = vsub.f32 %v296, %v1281
        %v1283 = vand.u32 %v1282, 4294901760
        %v1284 = vsub.f32 %v1282, %v1283
        %v1285 = vand.u32 %v1284, 4294901760
        %1286 = vmatpush.msra.mxu0 %v1285
        %v1287 = vand.u32 %v295, 4294901760
        %v1288 = vsub.f32 %v295, %v1287
        %v1289 = vand.u32 %v1288, 4294901760
        %v1290 = vsub.f32 %v1288, %v1289
        %v1291 = vand.u32 %v1290, 4294901760
        %1292 = vmatpush.msra.mxu0 %v1291
        %v1293 = vand.u32 %v294, 4294901760
        %v1294 = vsub.f32 %v294, %v1293
        %v1295 = vand.u32 %v1294, 4294901760
        %v1296 = vsub.f32 %v1294, %v1295
        %v1297 = vand.u32 %v1296, 4294901760
        %1298 = vmatpush.msra.mxu0 %v1297
        %v1299 = vand.u32 %v293, 4294901760
        %v1300 = vsub.f32 %v293, %v1299
        %v1301 = vand.u32 %v1300, 4294901760
        %v1302 = vsub.f32 %v1300, %v1301
        %v1303 = vand.u32 %v1302, 4294901760
        %1304 = vmatpush.msra.mxu0 %v1303
        %v1305 = vand.u32 %v292, 4294901760
        %v1306 = vsub.f32 %v292, %v1305
        %v1307 = vand.u32 %v1306, 4294901760
        %v1308 = vsub.f32 %v1306, %v1307
        %v1309 = vand.u32 %v1308, 4294901760
        %1310 = vmatpush.msra.mxu0 %v1309
        %v1311 = vand.u32 %v1074, 4294901760
        %1312 = vmatmul.f32.gmra.mxu0 %v1311
        %v1313 = vpop.f32.mrf.mxu0
        %v1314 = vadd.f32 %v1125, %v1313
        %v1315 = vand.u32 %v1075, 4294901760
        %1316 = vmatmul.f32.gmra.mxu0 %v1315
        %v1317 = vpop.f32.mrf.mxu0
        %v1318 = vadd.f32 %v1133, %v1317
        %v1319 = vand.u32 %v1076, 4294901760
        %1320 = vmatmul.f32.gmra.mxu0 %v1319
        %v1321 = vpop.f32.mrf.mxu0
        %v1322 = vadd.f32 %v1141, %v1321
        %v1323 = vand.u32 %v1077, 4294901760
        %1324 = vmatmul.f32.gmra.mxu0 %v1323
        %v1325 = vpop.f32.mrf.mxu0
        %v1326 = vadd.f32 %v1149, %v1325
        %v1327 = vand.u32 %v1078, 4294901760
        %1328 = vmatmul.f32.gmra.mxu0 %v1327
        %v1329 = vpop.f32.mrf.mxu0
        %v1330 = vadd.f32 %v1157, %v1329
        %v1331 = vand.u32 %v1079, 4294901760
        %1332 = vmatmul.f32.gmra.mxu0 %v1331
        %v1333 = vpop.f32.mrf.mxu0
        %v1334 = vadd.f32 %v1165, %v1333
        %v1335 = vand.u32 %v1080, 4294901760
        %1336 = vmatmul.f32.gmra.mxu0 %v1335
        %v1337 = vpop.f32.mrf.mxu0
        %v1338 = vadd.f32 %v1173, %v1337
        %v1339 = vand.u32 %v1081, 4294901760
        %1340 = vmatmul.f32.gmra.mxu0 %v1339
        %v1341 = vpop.f32.mrf.mxu0
        %v1342 = vadd.f32 %v1181, %v1341
        %v1343 = vand.u32 %v1082, 4294901760
        %1344 = vmatmul.f32.gmra.mxu0 %v1343
        %v1345 = vpop.f32.mrf.mxu0
        %v1346 = vadd.f32 %v1189, %v1345
        %v1347 = vand.u32 %v1083, 4294901760
        %1348 = vmatmul.f32.gmra.mxu0 %v1347
        %v1349 = vpop.f32.mrf.mxu0
        %v1350 = vadd.f32 %v1197, %v1349
        %v1351 = vand.u32 %v1084, 4294901760
        %1352 = vmatmul.f32.gmra.mxu0 %v1351
        %v1353 = vpop.f32.mrf.mxu0
        %v1354 = vadd.f32 %v1205, %v1353
        %v1355 = vand.u32 %v1085, 4294901760
        %1356 = vmatmul.f32.gmra.mxu0 %v1355
        %v1357 = vpop.f32.mrf.mxu0
        %v1358 = vadd.f32 %v1213, %v1357
        %1359 = vdwg.mxu0
        %v1360 = vand.u32 %v307, 4294901760
        %v1361 = vsub.f32 %v307, %v1360
        %1362 = vmatpush.msra.mxu0 %v1361
        %v1363 = vand.u32 %v306, 4294901760
        %v1364 = vsub.f32 %v306, %v1363
        %1365 = vmatpush.msra.mxu0 %v1364
        %v1366 = vand.u32 %v305, 4294901760
        %v1367 = vsub.f32 %v305, %v1366
        %1368 = vmatpush.msra.mxu0 %v1367
        %v1369 = vand.u32 %v304, 4294901760
        %v1370 = vsub.f32 %v304, %v1369
        %1371 = vmatpush.msra.mxu0 %v1370
        %v1372 = vand.u32 %v303, 4294901760
        %v1373 = vsub.f32 %v303, %v1372
        %1374 = vmatpush.msra.mxu0 %v1373
        %v1375 = vand.u32 %v302, 4294901760
        %v1376 = vsub.f32 %v302, %v1375
        %1377 = vmatpush.msra.mxu0 %v1376
        %v1378 = vand.u32 %v301, 4294901760
        %v1379 = vsub.f32 %v301, %v1378
        %1380 = vmatpush.msra.mxu0 %v1379
        %v1381 = vand.u32 %v300, 4294901760
        %v1382 = vsub.f32 %v300, %v1381
        %1383 = vmatpush.msra.mxu0 %v1382
        %v1384 = vand.u32 %v299, 4294901760
        %v1385 = vsub.f32 %v299, %v1384
        %1386 = vmatpush.msra.mxu0 %v1385
        %v1387 = vand.u32 %v298, 4294901760
        %v1388 = vsub.f32 %v298, %v1387
        %1389 = vmatpush.msra.mxu0 %v1388
        %v1390 = vand.u32 %v297, 4294901760
        %v1391 = vsub.f32 %v297, %v1390
        %1392 = vmatpush.msra.mxu0 %v1391
        %v1393 = vand.u32 %v296, 4294901760
        %v1394 = vsub.f32 %v296, %v1393
        %1395 = vmatpush.msra.mxu0 %v1394
        %v1396 = vand.u32 %v295, 4294901760
        %v1397 = vsub.f32 %v295, %v1396
        %1398 = vmatpush.msra.mxu0 %v1397
        %v1399 = vand.u32 %v294, 4294901760
        %v1400 = vsub.f32 %v294, %v1399
        %1401 = vmatpush.msra.mxu0 %v1400
        %v1402 = vand.u32 %v293, 4294901760
        %v1403 = vsub.f32 %v293, %v1402
        %1404 = vmatpush.msra.mxu0 %v1403
        %v1405 = vand.u32 %v292, 4294901760
        %v1406 = vsub.f32 %v292, %v1405
        %1407 = vmatpush.msra.mxu0 %v1406
        %v1408 = vand.u32 %v1074, 4294901760
        %v1409 = vsub.f32 %v1074, %v1408
        %1410 = vmatmul.f32.gmra.mxu0 %v1409
        %v1411 = vpop.f32.mrf.mxu0
        %v1412 = vadd.f32 %v1314, %v1411
        %v1413 = vand.u32 %v1075, 4294901760
        %v1414 = vsub.f32 %v1075, %v1413
        %1415 = vmatmul.f32.gmra.mxu0 %v1414
        %v1416 = vpop.f32.mrf.mxu0
        %v1417 = vadd.f32 %v1318, %v1416
        %v1418 = vand.u32 %v1076, 4294901760
        %v1419 = vsub.f32 %v1076, %v1418
        %1420 = vmatmul.f32.gmra.mxu0 %v1419
        %v1421 = vpop.f32.mrf.mxu0
        %v1422 = vadd.f32 %v1322, %v1421
        %v1423 = vand.u32 %v1077, 4294901760
        %v1424 = vsub.f32 %v1077, %v1423
        %1425 = vmatmul.f32.gmra.mxu0 %v1424
        %v1426 = vpop.f32.mrf.mxu0
        %v1427 = vadd.f32 %v1326, %v1426
        %v1428 = vand.u32 %v1078, 4294901760
        %v1429 = vsub.f32 %v1078, %v1428
        %1430 = vmatmul.f32.gmra.mxu0 %v1429
        %v1431 = vpop.f32.mrf.mxu0
        %v1432 = vadd.f32 %v1330, %v1431
        %v1433 = vand.u32 %v1079, 4294901760
        %v1434 = vsub.f32 %v1079, %v1433
        %1435 = vmatmul.f32.gmra.mxu0 %v1434
        %v1436 = vpop.f32.mrf.mxu0
        %v1437 = vadd.f32 %v1334, %v1436
        %v1438 = vand.u32 %v1080, 4294901760
        %v1439 = vsub.f32 %v1080, %v1438
        %1440 = vmatmul.f32.gmra.mxu0 %v1439
        %v1441 = vpop.f32.mrf.mxu0
        %v1442 = vadd.f32 %v1338, %v1441
        %v1443 = vand.u32 %v1081, 4294901760
        %v1444 = vsub.f32 %v1081, %v1443
        %1445 = vmatmul.f32.gmra.mxu0 %v1444
        %v1446 = vpop.f32.mrf.mxu0
        %v1447 = vadd.f32 %v1342, %v1446
        %v1448 = vand.u32 %v1082, 4294901760
        %v1449 = vsub.f32 %v1082, %v1448
        %1450 = vmatmul.f32.gmra.mxu0 %v1449
        %v1451 = vpop.f32.mrf.mxu0
        %v1452 = vadd.f32 %v1346, %v1451
        %v1453 = vand.u32 %v1083, 4294901760
        %v1454 = vsub.f32 %v1083, %v1453
        %1455 = vmatmul.f32.gmra.mxu0 %v1454
        %v1456 = vpop.f32.mrf.mxu0
        %v1457 = vadd.f32 %v1350, %v1456
        %v1458 = vand.u32 %v1084, 4294901760
        %v1459 = vsub.f32 %v1084, %v1458
        %1460 = vmatmul.f32.gmra.mxu0 %v1459
        %v1461 = vpop.f32.mrf.mxu0
        %v1462 = vadd.f32 %v1354, %v1461
        %v1463 = vand.u32 %v1085, 4294901760
        %v1464 = vsub.f32 %v1085, %v1463
        %1465 = vmatmul.f32.gmra.mxu0 %v1464
        %v1466 = vpop.f32.mrf.mxu0
        %v1467 = vadd.f32 %v1358, %v1466
        %1468 = vdwg.mxu0
        %v1469 = vand.u32 %v307, 4294901760
        %1470 = vmatpush.msra.mxu0 %v1469
        %v1471 = vand.u32 %v306, 4294901760
        %1472 = vmatpush.msra.mxu0 %v1471
        %v1473 = vand.u32 %v305, 4294901760
        %1474 = vmatpush.msra.mxu0 %v1473
        %v1475 = vand.u32 %v304, 4294901760
        %1476 = vmatpush.msra.mxu0 %v1475
        %v1477 = vand.u32 %v303, 4294901760
        %1478 = vmatpush.msra.mxu0 %v1477
        %v1479 = vand.u32 %v302, 4294901760
        %1480 = vmatpush.msra.mxu0 %v1479
        %v1481 = vand.u32 %v301, 4294901760
        %1482 = vmatpush.msra.mxu0 %v1481
        %v1483 = vand.u32 %v300, 4294901760
        %1484 = vmatpush.msra.mxu0 %v1483
        %v1485 = vand.u32 %v299, 4294901760
        %1486 = vmatpush.msra.mxu0 %v1485
        %v1487 = vand.u32 %v298, 4294901760
        %1488 = vmatpush.msra.mxu0 %v1487
        %v1489 = vand.u32 %v297, 4294901760
        %1490 = vmatpush.msra.mxu0 %v1489
        %v1491 = vand.u32 %v296, 4294901760
        %1492 = vmatpush.msra.mxu0 %v1491
        %v1493 = vand.u32 %v295, 4294901760
        %1494 = vmatpush.msra.mxu0 %v1493
        %v1495 = vand.u32 %v294, 4294901760
        %1496 = vmatpush.msra.mxu0 %v1495
        %v1497 = vand.u32 %v293, 4294901760
        %1498 = vmatpush.msra.mxu0 %v1497
        %v1499 = vand.u32 %v292, 4294901760
        %1500 = vmatpush.msra.mxu0 %v1499
        %v1501 = vand.u32 %v1074, 4294901760
        %v1502 = vsub.f32 %v1074, %v1501
        %v1503 = vand.u32 %v1502, 4294901760
        %1504 = vmatmul.f32.gmra.mxu0 %v1503
        %v1505 = vpop.f32.mrf.mxu0
        %v1506 = vadd.f32 %v1412, %v1505
        %v1507 = vand.u32 %v1075, 4294901760
        %v1508 = vsub.f32 %v1075, %v1507
        %v1509 = vand.u32 %v1508, 4294901760
        %1510 = vmatmul.f32.gmra.mxu0 %v1509
        %v1511 = vpop.f32.mrf.mxu0
        %v1512 = vadd.f32 %v1417, %v1511
        %v1513 = vand.u32 %v1076, 4294901760
        %v1514 = vsub.f32 %v1076, %v1513
        %v1515 = vand.u32 %v1514, 4294901760
        %1516 = vmatmul.f32.gmra.mxu0 %v1515
        %v1517 = vpop.f32.mrf.mxu0
        %v1518 = vadd.f32 %v1422, %v1517
        %v1519 = vand.u32 %v1077, 4294901760
        %v1520 = vsub.f32 %v1077, %v1519
        %v1521 = vand.u32 %v1520, 4294901760
        %1522 = vmatmul.f32.gmra.mxu0 %v1521
        %v1523 = vpop.f32.mrf.mxu0
        %v1524 = vadd.f32 %v1427, %v1523
        %v1525 = vand.u32 %v1078, 4294901760
        %v1526 = vsub.f32 %v1078, %v1525
        %v1527 = vand.u32 %v1526, 4294901760
        %1528 = vmatmul.f32.gmra.mxu0 %v1527
        %v1529 = vpop.f32.mrf.mxu0
        %v1530 = vadd.f32 %v1432, %v1529
        %v1531 = vand.u32 %v1079, 4294901760
        %v1532 = vsub.f32 %v1079, %v1531
        %v1533 = vand.u32 %v1532, 4294901760
        %1534 = vmatmul.f32.gmra.mxu0 %v1533
        %v1535 = vpop.f32.mrf.mxu0
        %v1536 = vadd.f32 %v1437, %v1535
        %v1537 = vand.u32 %v1080, 4294901760
        %v1538 = vsub.f32 %v1080, %v1537
        %v1539 = vand.u32 %v1538, 4294901760
        %1540 = vmatmul.f32.gmra.mxu0 %v1539
        %v1541 = vpop.f32.mrf.mxu0
        %v1542 = vadd.f32 %v1442, %v1541
        %v1543 = vand.u32 %v1081, 4294901760
        %v1544 = vsub.f32 %v1081, %v1543
        %v1545 = vand.u32 %v1544, 4294901760
        %1546 = vmatmul.f32.gmra.mxu0 %v1545
        %v1547 = vpop.f32.mrf.mxu0
        %v1548 = vadd.f32 %v1447, %v1547
        %v1549 = vand.u32 %v1082, 4294901760
        %v1550 = vsub.f32 %v1082, %v1549
        %v1551 = vand.u32 %v1550, 4294901760
        %1552 = vmatmul.f32.gmra.mxu0 %v1551
        %v1553 = vpop.f32.mrf.mxu0
        %v1554 = vadd.f32 %v1452, %v1553
        %v1555 = vand.u32 %v1083, 4294901760
        %v1556 = vsub.f32 %v1083, %v1555
        %v1557 = vand.u32 %v1556, 4294901760
        %1558 = vmatmul.f32.gmra.mxu0 %v1557
        %v1559 = vpop.f32.mrf.mxu0
        %v1560 = vadd.f32 %v1457, %v1559
        %v1561 = vand.u32 %v1084, 4294901760
        %v1562 = vsub.f32 %v1084, %v1561
        %v1563 = vand.u32 %v1562, 4294901760
        %1564 = vmatmul.f32.gmra.mxu0 %v1563
        %v1565 = vpop.f32.mrf.mxu0
        %v1566 = vadd.f32 %v1462, %v1565
        %v1567 = vand.u32 %v1085, 4294901760
        %v1568 = vsub.f32 %v1085, %v1567
        %v1569 = vand.u32 %v1568, 4294901760
        %1570 = vmatmul.f32.gmra.mxu0 %v1569
        %v1571 = vpop.f32.mrf.mxu0
        %v1572 = vadd.f32 %v1467, %v1571
        %1573 = vdwg.mxu0
        %v1574 = vand.u32 %v307, 4294901760
        %v1575 = vsub.f32 %v307, %v1574
        %v1576 = vand.u32 %v1575, 4294901760
        %1577 = vmatpush.msra.mxu0 %v1576
        %v1578 = vand.u32 %v306, 4294901760
        %v1579 = vsub.f32 %v306, %v1578
        %v1580 = vand.u32 %v1579, 4294901760
        %1581 = vmatpush.msra.mxu0 %v1580
        %v1582 = vand.u32 %v305, 4294901760
        %v1583 = vsub.f32 %v305, %v1582
        %v1584 = vand.u32 %v1583, 4294901760
        %1585 = vmatpush.msra.mxu0 %v1584
        %v1586 = vand.u32 %v304, 4294901760
        %v1587 = vsub.f32 %v304, %v1586
        %v1588 = vand.u32 %v1587, 4294901760
        %1589 = vmatpush.msra.mxu0 %v1588
        %v1590 = vand.u32 %v303, 4294901760
        %v1591 = vsub.f32 %v303, %v1590
        %v1592 = vand.u32 %v1591, 4294901760
        %1593 = vmatpush.msra.mxu0 %v1592
        %v1594 = vand.u32 %v302, 4294901760
        %v1595 = vsub.f32 %v302, %v1594
        %v1596 = vand.u32 %v1595, 4294901760
        %1597 = vmatpush.msra.mxu0 %v1596
        %v1598 = vand.u32 %v301, 4294901760
        %v1599 = vsub.f32 %v301, %v1598
        %v1600 = vand.u32 %v1599, 4294901760
        %1601 = vmatpush.msra.mxu0 %v1600
        %v1602 = vand.u32 %v300, 4294901760
        %v1603 = vsub.f32 %v300, %v1602
        %v1604 = vand.u32 %v1603, 4294901760
        %1605 = vmatpush.msra.mxu0 %v1604
        %v1606 = vand.u32 %v299, 4294901760
        %v1607 = vsub.f32 %v299, %v1606
        %v1608 = vand.u32 %v1607, 4294901760
        %1609 = vmatpush.msra.mxu0 %v1608
        %v1610 = vand.u32 %v298, 4294901760
        %v1611 = vsub.f32 %v298, %v1610
        %v1612 = vand.u32 %v1611, 4294901760
        %1613 = vmatpush.msra.mxu0 %v1612
        %v1614 = vand.u32 %v297, 4294901760
        %v1615 = vsub.f32 %v297, %v1614
        %v1616 = vand.u32 %v1615, 4294901760
        %1617 = vmatpush.msra.mxu0 %v1616
        %v1618 = vand.u32 %v296, 4294901760
        %v1619 = vsub.f32 %v296, %v1618
        %v1620 = vand.u32 %v1619, 4294901760
        %1621 = vmatpush.msra.mxu0 %v1620
        %v1622 = vand.u32 %v295, 4294901760
        %v1623 = vsub.f32 %v295, %v1622
        %v1624 = vand.u32 %v1623, 4294901760
        %1625 = vmatpush.msra.mxu0 %v1624
        %v1626 = vand.u32 %v294, 4294901760
        %v1627 = vsub.f32 %v294, %v1626
        %v1628 = vand.u32 %v1627, 4294901760
        %1629 = vmatpush.msra.mxu0 %v1628
        %v1630 = vand.u32 %v293, 4294901760
        %v1631 = vsub.f32 %v293, %v1630
        %v1632 = vand.u32 %v1631, 4294901760
        %1633 = vmatpush.msra.mxu0 %v1632
        %v1634 = vand.u32 %v292, 4294901760
        %v1635 = vsub.f32 %v292, %v1634
        %v1636 = vand.u32 %v1635, 4294901760
        %1637 = vmatpush.msra.mxu0 %v1636
        %v1638 = vand.u32 %v1074, 4294901760
        %1639 = vmatmul.f32.gmra.mxu0 %v1638
        %v1640 = vpop.f32.mrf.mxu0
        %v1641 = vadd.f32 %v1506, %v1640
        %v1642 = vand.u32 %v1075, 4294901760
        %1643 = vmatmul.f32.gmra.mxu0 %v1642
        %v1644 = vpop.f32.mrf.mxu0
        %v1645 = vadd.f32 %v1512, %v1644
        %v1646 = vand.u32 %v1076, 4294901760
        %1647 = vmatmul.f32.gmra.mxu0 %v1646
        %v1648 = vpop.f32.mrf.mxu0
        %v1649 = vadd.f32 %v1518, %v1648
        %v1650 = vand.u32 %v1077, 4294901760
        %1651 = vmatmul.f32.gmra.mxu0 %v1650
        %v1652 = vpop.f32.mrf.mxu0
        %v1653 = vadd.f32 %v1524, %v1652
        %v1654 = vand.u32 %v1078, 4294901760
        %1655 = vmatmul.f32.gmra.mxu0 %v1654
        %v1656 = vpop.f32.mrf.mxu0
        %v1657 = vadd.f32 %v1530, %v1656
        %v1658 = vand.u32 %v1079, 4294901760
        %1659 = vmatmul.f32.gmra.mxu0 %v1658
        %v1660 = vpop.f32.mrf.mxu0
        %v1661 = vadd.f32 %v1536, %v1660
        %v1662 = vand.u32 %v1080, 4294901760
        %1663 = vmatmul.f32.gmra.mxu0 %v1662
        %v1664 = vpop.f32.mrf.mxu0
        %v1665 = vadd.f32 %v1542, %v1664
        %v1666 = vand.u32 %v1081, 4294901760
        %1667 = vmatmul.f32.gmra.mxu0 %v1666
        %v1668 = vpop.f32.mrf.mxu0
        %v1669 = vadd.f32 %v1548, %v1668
        %v1670 = vand.u32 %v1082, 4294901760
        %1671 = vmatmul.f32.gmra.mxu0 %v1670
        %v1672 = vpop.f32.mrf.mxu0
        %v1673 = vadd.f32 %v1554, %v1672
        %v1674 = vand.u32 %v1083, 4294901760
        %1675 = vmatmul.f32.gmra.mxu0 %v1674
        %v1676 = vpop.f32.mrf.mxu0
        %v1677 = vadd.f32 %v1560, %v1676
        %v1678 = vand.u32 %v1084, 4294901760
        %1679 = vmatmul.f32.gmra.mxu0 %v1678
        %v1680 = vpop.f32.mrf.mxu0
        %v1681 = vadd.f32 %v1566, %v1680
        %v1682 = vand.u32 %v1085, 4294901760
        %1683 = vmatmul.f32.gmra.mxu0 %v1682
        %v1684 = vpop.f32.mrf.mxu0
        %v1685 = vadd.f32 %v1572, %v1684
        %1686 = vdwg.mxu0
        %v1687 = vand.u32 %v307, 4294901760
        %1688 = vmatpush.msra.mxu0 %v1687
        %v1689 = vand.u32 %v306, 4294901760
        %1690 = vmatpush.msra.mxu0 %v1689
        %v1691 = vand.u32 %v305, 4294901760
        %1692 = vmatpush.msra.mxu0 %v1691
        %v1693 = vand.u32 %v304, 4294901760
        %1694 = vmatpush.msra.mxu0 %v1693
        %v1695 = vand.u32 %v303, 4294901760
        %1696 = vmatpush.msra.mxu0 %v1695
        %v1697 = vand.u32 %v302, 4294901760
        %1698 = vmatpush.msra.mxu0 %v1697
        %v1699 = vand.u32 %v301, 4294901760
        %1700 = vmatpush.msra.mxu0 %v1699
        %v1701 = vand.u32 %v300, 4294901760
        %1702 = vmatpush.msra.mxu0 %v1701
        %v1703 = vand.u32 %v299, 4294901760
        %1704 = vmatpush.msra.mxu0 %v1703
        %v1705 = vand.u32 %v298, 4294901760
        %1706 = vmatpush.msra.mxu0 %v1705
        %v1707 = vand.u32 %v297, 4294901760
        %1708 = vmatpush.msra.mxu0 %v1707
        %v1709 = vand.u32 %v296, 4294901760
        %1710 = vmatpush.msra.mxu0 %v1709
        %v1711 = vand.u32 %v295, 4294901760
        %1712 = vmatpush.msra.mxu0 %v1711
        %v1713 = vand.u32 %v294, 4294901760
        %1714 = vmatpush.msra.mxu0 %v1713
        %v1715 = vand.u32 %v293, 4294901760
        %1716 = vmatpush.msra.mxu0 %v1715
        %v1717 = vand.u32 %v292, 4294901760
        %1718 = vmatpush.msra.mxu0 %v1717
        %v1719 = vand.u32 %v1074, 4294901760
        %1720 = vmatmul.f32.gmra.mxu0 %v1719
        %v1721 = vpop.f32.mrf.mxu0
        %v1722 = vadd.f32 %v1641, %v1721
        %v1723 = vand.u32 %v1075, 4294901760
        %1724 = vmatmul.f32.gmra.mxu0 %v1723
        %v1725 = vpop.f32.mrf.mxu0
        %v1726 = vadd.f32 %v1645, %v1725
        %v1727 = vand.u32 %v1076, 4294901760
        %1728 = vmatmul.f32.gmra.mxu0 %v1727
        %v1729 = vpop.f32.mrf.mxu0
        %v1730 = vadd.f32 %v1649, %v1729
        %v1731 = vand.u32 %v1077, 4294901760
        %1732 = vmatmul.f32.gmra.mxu0 %v1731
        %v1733 = vpop.f32.mrf.mxu0
        %v1734 = vadd.f32 %v1653, %v1733
        %v1735 = vand.u32 %v1078, 4294901760
        %1736 = vmatmul.f32.gmra.mxu0 %v1735
        %v1737 = vpop.f32.mrf.mxu0
        %v1738 = vadd.f32 %v1657, %v1737
        %v1739 = vand.u32 %v1079, 4294901760
        %1740 = vmatmul.f32.gmra.mxu0 %v1739
        %v1741 = vpop.f32.mrf.mxu0
        %v1742 = vadd.f32 %v1661, %v1741
        %v1743 = vand.u32 %v1080, 4294901760
        %1744 = vmatmul.f32.gmra.mxu0 %v1743
        %v1745 = vpop.f32.mrf.mxu0
        %v1746 = vadd.f32 %v1665, %v1745
        %v1747 = vand.u32 %v1081, 4294901760
        %1748 = vmatmul.f32.gmra.mxu0 %v1747
        %v1749 = vpop.f32.mrf.mxu0
        %v1750 = vadd.f32 %v1669, %v1749
        %v1751 = vand.u32 %v1082, 4294901760
        %1752 = vmatmul.f32.gmra.mxu0 %v1751
        %v1753 = vpop.f32.mrf.mxu0
        %v1754 = vadd.f32 %v1673, %v1753
        %v1755 = vand.u32 %v1083, 4294901760
        %1756 = vmatmul.f32.gmra.mxu0 %v1755
        %v1757 = vpop.f32.mrf.mxu0
        %v1758 = vadd.f32 %v1677, %v1757
        %v1759 = vand.u32 %v1084, 4294901760
        %1760 = vmatmul.f32.gmra.mxu0 %v1759
        %v1761 = vpop.f32.mrf.mxu0
        %v1762 = vadd.f32 %v1681, %v1761
        %v1763 = vand.u32 %v1085, 4294901760
        %1764 = vmatmul.f32.gmra.mxu0 %v1763
        %v1765 = vpop.f32.mrf.mxu0
        %v1766 = vadd.f32 %v1685, %v1765
        %1767 = vdwg.mxu0
        %v1768 = vmul.f32 %v1722, 0.0078125
        %v1769 = vmul.f32 %v1726, 0.0078125
        %v1770 = vmul.f32 %v1730, 0.0078125
        %v1771 = vmul.f32 %v1734, 0.0078125
        %v1772 = vmul.f32 %v1738, 0.0078125
        %v1773 = vmul.f32 %v1742, 0.0078125
        %v1774 = vmul.f32 %v1746, 0.0078125
        %v1775 = vmul.f32 %v1750, 0.0078125
        %v1776 = vmul.f32 %v1754, 0.0078125
        %v1777 = vmul.f32 %v1758, 0.0078125
        %v1778 = vmul.f32 %v1762, 0.0078125
        %v1779 = vmul.f32 %v1766, 0.0078125
        %v1780 = vadd.f32 %v1768, 1e-05
        %v1781 = vadd.f32 %v1769, 1e-05
        %v1782 = vadd.f32 %v1770, 1e-05
        %v1783 = vadd.f32 %v1771, 1e-05
        %v1784 = vadd.f32 %v1772, 1e-05
        %v1785 = vadd.f32 %v1773, 1e-05
        %v1786 = vadd.f32 %v1774, 1e-05
        %v1787 = vadd.f32 %v1775, 1e-05
        %v1788 = vadd.f32 %v1776, 1e-05
        %v1789 = vadd.f32 %v1777, 1e-05
        %v1790 = vadd.f32 %v1778, 1e-05
        %v1791 = vadd.f32 %v1779, 1e-05
        %v1792 = vrsqrt.pop %v1780
        %v1793 = vmul.f32 %v1792, %v1780
        %v1794 = vmul.f32 %v1793, %v1792
        %v1795 = vmul.f32 0.5, %v1794
        %v1796 = vsub.f32 1.5, %v1795
        %v1797 = vmul.f32 %v1792, %v1796
        %vm1798 = vweird.f32 %v1780
        %vm1799 = vweird.f32 %v1792
        %vm1800 = vmor %vm1798, %vm1799
        %v1801 = vsel %vm1800, %v1792, %v1797
        %v1802 = vrsqrt.pop %v1781
        %v1803 = vmul.f32 %v1802, %v1781
        %v1804 = vmul.f32 %v1803, %v1802
        %v1805 = vmul.f32 0.5, %v1804
        %v1806 = vsub.f32 1.5, %v1805
        %v1807 = vmul.f32 %v1802, %v1806
        %vm1808 = vweird.f32 %v1781
        %vm1809 = vweird.f32 %v1802
        %vm1810 = vmor %vm1808, %vm1809
        %v1811 = vsel %vm1810, %v1802, %v1807
        %v1812 = vrsqrt.pop %v1782
        %v1813 = vmul.f32 %v1812, %v1782
        %v1814 = vmul.f32 %v1813, %v1812
        %v1815 = vmul.f32 0.5, %v1814
        %v1816 = vsub.f32 1.5, %v1815
        %v1817 = vmul.f32 %v1812, %v1816
        %vm1818 = vweird.f32 %v1782
        %vm1819 = vweird.f32 %v1812
        %vm1820 = vmor %vm1818, %vm1819
        %v1821 = vsel %vm1820, %v1812, %v1817
        %v1822 = vrsqrt.pop %v1783
        %v1823 = vmul.f32 %v1822, %v1783
        %v1824 = vmul.f32 %v1823, %v1822
        %v1825 = vmul.f32 0.5, %v1824
        %v1826 = vsub.f32 1.5, %v1825
        %v1827 = vmul.f32 %v1822, %v1826
        %vm1828 = vweird.f32 %v1783
        %vm1829 = vweird.f32 %v1822
        %vm1830 = vmor %vm1828, %vm1829
        %v1831 = vsel %vm1830, %v1822, %v1827
        %v1832 = vrsqrt.pop %v1784
        %v1833 = vmul.f32 %v1832, %v1784
        %v1834 = vmul.f32 %v1833, %v1832
        %v1835 = vmul.f32 0.5, %v1834
        %v1836 = vsub.f32 1.5, %v1835
        %v1837 = vmul.f32 %v1832, %v1836
        %vm1838 = vweird.f32 %v1784
        %vm1839 = vweird.f32 %v1832
        %vm1840 = vmor %vm1838, %vm1839
        %v1841 = vsel %vm1840, %v1832, %v1837
        %v1842 = vrsqrt.pop %v1785
        %v1843 = vmul.f32 %v1842, %v1785
        %v1844 = vmul.f32 %v1843, %v1842
        %v1845 = vmul.f32 0.5, %v1844
        %v1846 = vsub.f32 1.5, %v1845
        %v1847 = vmul.f32 %v1842, %v1846
        %vm1848 = vweird.f32 %v1785
        %vm1849 = vweird.f32 %v1842
        %vm1850 = vmor %vm1848, %vm1849
        %v1851 = vsel %vm1850, %v1842, %v1847
        %v1852 = vrsqrt.pop %v1786
        %v1853 = vmul.f32 %v1852, %v1786
        %v1854 = vmul.f32 %v1853, %v1852
        %v1855 = vmul.f32 0.5, %v1854
        %v1856 = vsub.f32 1.5, %v1855
        %v1857 = vmul.f32 %v1852, %v1856
        %vm1858 = vweird.f32 %v1786
        %vm1859 = vweird.f32 %v1852
        %vm1860 = vmor %vm1858, %vm1859
        %v1861 = vsel %vm1860, %v1852, %v1857
        %v1862 = vrsqrt.pop %v1787
        %v1863 = vmul.f32 %v1862, %v1787
        %v1864 = vmul.f32 %v1863, %v1862
        %v1865 = vmul.f32 0.5, %v1864
        %v1866 = vsub.f32 1.5, %v1865
        %v1867 = vmul.f32 %v1862, %v1866
        %vm1868 = vweird.f32 %v1787
        %vm1869 = vweird.f32 %v1862
        %vm1870 = vmor %vm1868, %vm1869
        %v1871 = vsel %vm1870, %v1862, %v1867
        %v1872 = vrsqrt.pop %v1788
        %v1873 = vmul.f32 %v1872, %v1788
        %v1874 = vmul.f32 %v1873, %v1872
        %v1875 = vmul.f32 0.5, %v1874
        %v1876 = vsub.f32 1.5, %v1875
        %v1877 = vmul.f32 %v1872, %v1876
        %vm1878 = vweird.f32 %v1788
        %vm1879 = vweird.f32 %v1872
        %vm1880 = vmor %vm1878, %vm1879
        %v1881 = vsel %vm1880, %v1872, %v1877
        %v1882 = vrsqrt.pop %v1789
        %v1883 = vmul.f32 %v1882, %v1789
        %v1884 = vmul.f32 %v1883, %v1882
        %v1885 = vmul.f32 0.5, %v1884
        %v1886 = vsub.f32 1.5, %v1885
        %v1887 = vmul.f32 %v1882, %v1886
        %vm1888 = vweird.f32 %v1789
        %vm1889 = vweird.f32 %v1882
        %vm1890 = vmor %vm1888, %vm1889
        %v1891 = vsel %vm1890, %v1882, %v1887
        %v1892 = vrsqrt.pop %v1790
        %v1893 = vmul.f32 %v1892, %v1790
        %v1894 = vmul.f32 %v1893, %v1892
        %v1895 = vmul.f32 0.5, %v1894
        %v1896 = vsub.f32 1.5, %v1895
        %v1897 = vmul.f32 %v1892, %v1896
        %vm1898 = vweird.f32 %v1790
        %vm1899 = vweird.f32 %v1892
        %vm1900 = vmor %vm1898, %vm1899
        %v1901 = vsel %vm1900, %v1892, %v1897
        %v1902 = vrsqrt.pop %v1791
        %v1903 = vmul.f32 %v1902, %v1791
        %v1904 = vmul.f32 %v1903, %v1902
        %v1905 = vmul.f32 0.5, %v1904
        %v1906 = vsub.f32 1.5, %v1905
        %v1907 = vmul.f32 %v1902, %v1906
        %vm1908 = vweird.f32 %v1791
        %vm1909 = vweird.f32 %v1902
        %vm1910 = vmor %vm1908, %vm1909
        %v1911 = vsel %vm1910, %v1902, %v1907
        %1913 = vset.pattern.permute.xlu0 0
        %1914 = vperm.xlu0 %1913, %v1801
        %v1915 = vpop.permute.xlu0 %1914
        %1918 = vset.pattern.permute.xlu0 0
        %1919 = vperm.xlu0 %1918, %v1811
        %v1920 = vpop.permute.xlu0 %1919
        %1923 = vset.pattern.permute.xlu0 0
        %1924 = vperm.xlu0 %1923, %v1821
        %v1925 = vpop.permute.xlu0 %1924
        %1928 = vset.pattern.permute.xlu0 0
        %1929 = vperm.xlu0 %1928, %v1831
        %v1930 = vpop.permute.xlu0 %1929
        %1933 = vset.pattern.permute.xlu0 0
        %1934 = vperm.xlu0 %1933, %v1841
        %v1935 = vpop.permute.xlu0 %1934
        %1938 = vset.pattern.permute.xlu0 0
        %1939 = vperm.xlu0 %1938, %v1851
        %v1940 = vpop.permute.xlu0 %1939
        %1943 = vset.pattern.permute.xlu0 0
        %1944 = vperm.xlu0 %1943, %v1861
        %v1945 = vpop.permute.xlu0 %1944
        %1948 = vset.pattern.permute.xlu0 0
        %1949 = vperm.xlu0 %1948, %v1871
        %v1950 = vpop.permute.xlu0 %1949
        %1953 = vset.pattern.permute.xlu0 0
        %1954 = vperm.xlu0 %1953, %v1881
        %v1955 = vpop.permute.xlu0 %1954
        %1958 = vset.pattern.permute.xlu0 0
        %1959 = vperm.xlu0 %1958, %v1891
        %v1960 = vpop.permute.xlu0 %1959
        %1963 = vset.pattern.permute.xlu0 0
        %1964 = vperm.xlu0 %1963, %v1901
        %v1965 = vpop.permute.xlu0 %1964
        %1968 = vset.pattern.permute.xlu0 0
        %1969 = vperm.xlu0 %1968, %v1911
        %v1970 = vpop.permute.xlu0 %1969
        %v1972 = vmul.f32 %v1062, %v1915
        %v1973 = vmul.f32 %v1063, %v1920
        %v1974 = vmul.f32 %v1064, %v1925
        %v1975 = vmul.f32 %v1065, %v1930
        %v1976 = vmul.f32 %v1066, %v1935
        %v1977 = vmul.f32 %v1067, %v1940
        %v1978 = vmul.f32 %v1068, %v1945
        %v1979 = vmul.f32 %v1069, %v1950
        %v1980 = vmul.f32 %v1070, %v1955
        %v1981 = vmul.f32 %v1071, %v1960
        %v1982 = vmul.f32 %v1072, %v1965
        %v1983 = vmul.f32 %v1073, %v1970
        %v1984 = vld [vmem:[%s1] sm:$0x1]
        %v1986 = vperm.slane %v1984, 0
        %v1988 = vmul.f32 %v1972, %v1986
        %v1989 = vmul.f32 %v1973, %v1986
        %v1990 = vmul.f32 %v1974, %v1986
        %v1991 = vmul.f32 %v1975, %v1986
        %v1992 = vmul.f32 %v1976, %v1986
        %v1993 = vmul.f32 %v1977, %v1986
        %v1994 = vmul.f32 %v1978, %v1986
        %v1995 = vmul.f32 %v1979, %v1986
        %v1996 = vmul.f32 %v1980, %v1986
        %v1997 = vmul.f32 %v1981, %v1986
        %v1998 = vmul.f32 %v1982, %v1986
        %v1999 = vmul.f32 %v1983, %v1986
        %v2000 = vld [vmem:[%s2] sm:$0x1]
        %v2002 = vperm.slane %v2000, 0
        %v2004 = vadd.f32 %v1988, %v2002
        %v2005 = vadd.f32 %v1989, %v2002
        %v2006 = vadd.f32 %v1990, %v2002
        %v2007 = vadd.f32 %v1991, %v2002
        %v2008 = vadd.f32 %v1992, %v2002
        %v2009 = vadd.f32 %v1993, %v2002
        %v2010 = vadd.f32 %v1994, %v2002
        %v2011 = vadd.f32 %v1995, %v2002
        %v2012 = vadd.f32 %v1996, %v2002
        %v2013 = vadd.f32 %v1997, %v2002
        %v2014 = vadd.f32 %v1998, %v2002
        %v2015 = vadd.f32 %v1999, %v2002
        %v2016 = vmul.f32 %v2004, 0.5
        %v2017 = vmul.f32 %v2005, 0.5
        %v2018 = vmul.f32 %v2006, 0.5
        %v2019 = vmul.f32 %v2007, 0.5
        %v2020 = vmul.f32 %v2008, 0.5
        %v2021 = vmul.f32 %v2009, 0.5
        %v2022 = vmul.f32 %v2010, 0.5
        %v2023 = vmul.f32 %v2011, 0.5
        %v2024 = vmul.f32 %v2012, 0.5
        %v2025 = vmul.f32 %v2013, 0.5
        %v2026 = vmul.f32 %v2014, 0.5
        %v2027 = vmul.f32 %v2015, 0.5
        %v2028 = vmul.f32 %v2004, 0.70710677
        %v2029 = vmul.f32 %v2005, 0.70710677
        %v2030 = vmul.f32 %v2006, 0.70710677
        %v2031 = vmul.f32 %v2007, 0.70710677
        %v2032 = vmul.f32 %v2008, 0.70710677
        %v2033 = vmul.f32 %v2009, 0.70710677
        %v2034 = vmul.f32 %v2010, 0.70710677
        %v2035 = vmul.f32 %v2011, 0.70710677
        %v2036 = vmul.f32 %v2012, 0.70710677
        %v2037 = vmul.f32 %v2013, 0.70710677
        %v2038 = vmul.f32 %v2014, 0.70710677
        %v2039 = vmul.f32 %v2015, 0.70710677
        %v2040 = vmul.f32 %v2028, %v2028
        %v2041 = vmin.f32 16.0, %v2040
        %v2042 = vmul.f32 %v2041, 2.1237322e-06
        %v2043 = vadd.f32 %v2042, 0.00028619796
        %v2044 = vmul.f32 %v2041, %v2043
        %v2045 = vadd.f32 %v2044, 0.0036580483
        %v2046 = vmul.f32 %v2041, %v2045
        %v2047 = vadd.f32 %v2046, 0.05243302
        %v2048 = vmul.f32 %v2041, %v2047
        %v2049 = vadd.f32 %v2048, 0.18741608
        %v2050 = vmul.f32 %v2041, %v2049
        %v2051 = vadd.f32 %v2050, 1.1283791
        %v2052 = vmul.f32 %v2028, %v2051
        %v2053 = vmul.f32 %v2041, 3.8918573e-05
        %v2054 = vadd.f32 %v2053, 0.001143296
        %v2055 = vmul.f32 %v2041, %v2054
        %v2056 = vadd.f32 %v2055, 0.014752088
        %v2057 = vmul.f32 %v2041, %v2056
        %v2058 = vadd.f32 %v2057, 0.112945676
        %v2059 = vmul.f32 %v2041, %v2058
        %v2060 = vadd.f32 %v2059, 0.4994258
        %v2061 = vmul.f32 %v2041, %v2060
        %v2062 = vadd.f32 %v2061, 1.0
        %v2063 = vrcp.pop %v2062
        %v2064 = vmul.f32 %v2062, %v2063
        %v2065 = vsub.f32 1.0, %v2064
        %v2066 = vmul.f32 %v2063, %v2065
        %v2067 = vadd.f32 %v2063, %v2066
        %vm2068 = vweird.f32 %v2062
        %vm2069 = vweird.f32 %v2063
        %vm2070 = vmor %vm2068, %vm2069
        %v2071 = vsel %vm2070, %v2063, %v2067
        %v2072 = vand.u32 2147483647, %v2062
        %vm2073 = vcmp.eq.f32.partialorder %v2072, 8.507059e+37
        %v2074 = vand.u32 %v2062, 2147483648
        %v2075 = vor.u32 1.1754944e-38, %v2074
        %v2076 = vsel %vm2073, %v2075, %v2071
        %v2077 = vmul.f32 %v2052, %v2076
        %v2078 = vmin.f32 %v2077, 1.0
        %v2079 = vmax.f32 %v2078, -1.0
        %v2080 = vmul.f32 %v2029, %v2029
        %v2081 = vmin.f32 16.0, %v2080
        %v2082 = vmul.f32 %v2081, 2.1237322e-06
        %v2083 = vadd.f32 %v2082, 0.00028619796
        %v2084 = vmul.f32 %v2081, %v2083
        %v2085 = vadd.f32 %v2084, 0.0036580483
        %v2086 = vmul.f32 %v2081, %v2085
        %v2087 = vadd.f32 %v2086, 0.05243302
        %v2088 = vmul.f32 %v2081, %v2087
        %v2089 = vadd.f32 %v2088, 0.18741608
        %v2090 = vmul.f32 %v2081, %v2089
        %v2091 = vadd.f32 %v2090, 1.1283791
        %v2092 = vmul.f32 %v2029, %v2091
        %v2093 = vmul.f32 %v2081, 3.8918573e-05
        %v2094 = vadd.f32 %v2093, 0.001143296
        %v2095 = vmul.f32 %v2081, %v2094
        %v2096 = vadd.f32 %v2095, 0.014752088
        %v2097 = vmul.f32 %v2081, %v2096
        %v2098 = vadd.f32 %v2097, 0.112945676
        %v2099 = vmul.f32 %v2081, %v2098
        %v2100 = vadd.f32 %v2099, 0.4994258
        %v2101 = vmul.f32 %v2081, %v2100
        %v2102 = vadd.f32 %v2101, 1.0
        %v2103 = vrcp.pop %v2102
        %v2104 = vmul.f32 %v2102, %v2103
        %v2105 = vsub.f32 1.0, %v2104
        %v2106 = vmul.f32 %v2103, %v2105
        %v2107 = vadd.f32 %v2103, %v2106
        %vm2108 = vweird.f32 %v2102
        %vm2109 = vweird.f32 %v2103
        %vm2110 = vmor %vm2108, %vm2109
        %v2111 = vsel %vm2110, %v2103, %v2107
        %v2112 = vand.u32 2147483647, %v2102
        %vm2113 = vcmp.eq.f32.partialorder %v2112, 8.507059e+37
        %v2114 = vand.u32 %v2102, 2147483648
        %v2115 = vor.u32 1.1754944e-38, %v2114
        %v2116 = vsel %vm2113, %v2115, %v2111
        %v2117 = vmul.f32 %v2092, %v2116
        %v2118 = vmin.f32 %v2117, 1.0
        %v2119 = vmax.f32 %v2118, -1.0
        %v2120 = vmul.f32 %v2030, %v2030
        %v2121 = vmin.f32 16.0, %v2120
        %v2122 = vmul.f32 %v2121, 2.1237322e-06
        %v2123 = vadd.f32 %v2122, 0.00028619796
        %v2124 = vmul.f32 %v2121, %v2123
        %v2125 = vadd.f32 %v2124, 0.0036580483
        %v2126 = vmul.f32 %v2121, %v2125
        %v2127 = vadd.f32 %v2126, 0.05243302
        %v2128 = vmul.f32 %v2121, %v2127
        %v2129 = vadd.f32 %v2128, 0.18741608
        %v2130 = vmul.f32 %v2121, %v2129
        %v2131 = vadd.f32 %v2130, 1.1283791
        %v2132 = vmul.f32 %v2030, %v2131
        %v2133 = vmul.f32 %v2121, 3.8918573e-05
        %v2134 = vadd.f32 %v2133, 0.001143296
        %v2135 = vmul.f32 %v2121, %v2134
        %v2136 = vadd.f32 %v2135, 0.014752088
        %v2137 = vmul.f32 %v2121, %v2136
        %v2138 = vadd.f32 %v2137, 0.112945676
        %v2139 = vmul.f32 %v2121, %v2138
        %v2140 = vadd.f32 %v2139, 0.4994258
        %v2141 = vmul.f32 %v2121, %v2140
        %v2142 = vadd.f32 %v2141, 1.0
        %v2143 = vrcp.pop %v2142
        %v2144 = vmul.f32 %v2142, %v2143
        %v2145 = vsub.f32 1.0, %v2144
        %v2146 = vmul.f32 %v2143, %v2145
        %v2147 = vadd.f32 %v2143, %v2146
        %vm2148 = vweird.f32 %v2142
        %vm2149 = vweird.f32 %v2143
        %vm2150 = vmor %vm2148, %vm2149
        %v2151 = vsel %vm2150, %v2143, %v2147
        %v2152 = vand.u32 2147483647, %v2142
        %vm2153 = vcmp.eq.f32.partialorder %v2152, 8.507059e+37
        %v2154 = vand.u32 %v2142, 2147483648
        %v2155 = vor.u32 1.1754944e-38, %v2154
        %v2156 = vsel %vm2153, %v2155, %v2151
        %v2157 = vmul.f32 %v2132, %v2156
        %v2158 = vmin.f32 %v2157, 1.0
        %v2159 = vmax.f32 %v2158, -1.0
        %v2160 = vmul.f32 %v2031, %v2031
        %v2161 = vmin.f32 16.0, %v2160
        %v2162 = vmul.f32 %v2161, 2.1237322e-06
        %v2163 = vadd.f32 %v2162, 0.00028619796
        %v2164 = vmul.f32 %v2161, %v2163
        %v2165 = vadd.f32 %v2164, 0.0036580483
        %v2166 = vmul.f32 %v2161, %v2165
        %v2167 = vadd.f32 %v2166, 0.05243302
        %v2168 = vmul.f32 %v2161, %v2167
        %v2169 = vadd.f32 %v2168, 0.18741608
        %v2170 = vmul.f32 %v2161, %v2169
        %v2171 = vadd.f32 %v2170, 1.1283791
        %v2172 = vmul.f32 %v2031, %v2171
        %v2173 = vmul.f32 %v2161, 3.8918573e-05
        %v2174 = vadd.f32 %v2173, 0.001143296
        %v2175 = vmul.f32 %v2161, %v2174
        %v2176 = vadd.f32 %v2175, 0.014752088
        %v2177 = vmul.f32 %v2161, %v2176
        %v2178 = vadd.f32 %v2177, 0.112945676
        %v2179 = vmul.f32 %v2161, %v2178
        %v2180 = vadd.f32 %v2179, 0.4994258
        %v2181 = vmul.f32 %v2161, %v2180
        %v2182 = vadd.f32 %v2181, 1.0
        %v2183 = vrcp.pop %v2182
        %v2184 = vmul.f32 %v2182, %v2183
        %v2185 = vsub.f32 1.0, %v2184
        %v2186 = vmul.f32 %v2183, %v2185
        %v2187 = vadd.f32 %v2183, %v2186
        %vm2188 = vweird.f32 %v2182
        %vm2189 = vweird.f32 %v2183
        %vm2190 = vmor %vm2188, %vm2189
        %v2191 = vsel %vm2190, %v2183, %v2187
        %v2192 = vand.u32 2147483647, %v2182
        %vm2193 = vcmp.eq.f32.partialorder %v2192, 8.507059e+37
        %v2194 = vand.u32 %v2182, 2147483648
        %v2195 = vor.u32 1.1754944e-38, %v2194
        %v2196 = vsel %vm2193, %v2195, %v2191
        %v2197 = vmul.f32 %v2172, %v2196
        %v2198 = vmin.f32 %v2197, 1.0
        %v2199 = vmax.f32 %v2198, -1.0
        %v2200 = vmul.f32 %v2032, %v2032
        %v2201 = vmin.f32 16.0, %v2200
        %v2202 = vmul.f32 %v2201, 2.1237322e-06
        %v2203 = vadd.f32 %v2202, 0.00028619796
        %v2204 = vmul.f32 %v2201, %v2203
        %v2205 = vadd.f32 %v2204, 0.0036580483
        %v2206 = vmul.f32 %v2201, %v2205
        %v2207 = vadd.f32 %v2206, 0.05243302
        %v2208 = vmul.f32 %v2201, %v2207
        %v2209 = vadd.f32 %v2208, 0.18741608
        %v2210 = vmul.f32 %v2201, %v2209
        %v2211 = vadd.f32 %v2210, 1.1283791
        %v2212 = vmul.f32 %v2032, %v2211
        %v2213 = vmul.f32 %v2201, 3.8918573e-05
        %v2214 = vadd.f32 %v2213, 0.001143296
        %v2215 = vmul.f32 %v2201, %v2214
        %v2216 = vadd.f32 %v2215, 0.014752088
        %v2217 = vmul.f32 %v2201, %v2216
        %v2218 = vadd.f32 %v2217, 0.112945676
        %v2219 = vmul.f32 %v2201, %v2218
        %v2220 = vadd.f32 %v2219, 0.4994258
        %v2221 = vmul.f32 %v2201, %v2220
        %v2222 = vadd.f32 %v2221, 1.0
        %v2223 = vrcp.pop %v2222
        %v2224 = vmul.f32 %v2222, %v2223
        %v2225 = vsub.f32 1.0, %v2224
        %v2226 = vmul.f32 %v2223, %v2225
        %v2227 = vadd.f32 %v2223, %v2226
        %vm2228 = vweird.f32 %v2222
        %vm2229 = vweird.f32 %v2223
        %vm2230 = vmor %vm2228, %vm2229
        %v2231 = vsel %vm2230, %v2223, %v2227
        %v2232 = vand.u32 2147483647, %v2222
        %vm2233 = vcmp.eq.f32.partialorder %v2232, 8.507059e+37
        %v2234 = vand.u32 %v2222, 2147483648
        %v2235 = vor.u32 1.1754944e-38, %v2234
        %v2236 = vsel %vm2233, %v2235, %v2231
        %v2237 = vmul.f32 %v2212, %v2236
        %v2238 = vmin.f32 %v2237, 1.0
        %v2239 = vmax.f32 %v2238, -1.0
        %v2240 = vmul.f32 %v2033, %v2033
        %v2241 = vmin.f32 16.0, %v2240
        %v2242 = vmul.f32 %v2241, 2.1237322e-06
        %v2243 = vadd.f32 %v2242, 0.00028619796
        %v2244 = vmul.f32 %v2241, %v2243
        %v2245 = vadd.f32 %v2244, 0.0036580483
        %v2246 = vmul.f32 %v2241, %v2245
        %v2247 = vadd.f32 %v2246, 0.05243302
        %v2248 = vmul.f32 %v2241, %v2247
        %v2249 = vadd.f32 %v2248, 0.18741608
        %v2250 = vmul.f32 %v2241, %v2249
        %v2251 = vadd.f32 %v2250, 1.1283791
        %v2252 = vmul.f32 %v2033, %v2251
        %v2253 = vmul.f32 %v2241, 3.8918573e-05
        %v2254 = vadd.f32 %v2253, 0.001143296
        %v2255 = vmul.f32 %v2241, %v2254
        %v2256 = vadd.f32 %v2255, 0.014752088
        %v2257 = vmul.f32 %v2241, %v2256
        %v2258 = vadd.f32 %v2257, 0.112945676
        %v2259 = vmul.f32 %v2241, %v2258
        %v2260 = vadd.f32 %v2259, 0.4994258
        %v2261 = vmul.f32 %v2241, %v2260
        %v2262 = vadd.f32 %v2261, 1.0
        %v2263 = vrcp.pop %v2262
        %v2264 = vmul.f32 %v2262, %v2263
        %v2265 = vsub.f32 1.0, %v2264
        %v2266 = vmul.f32 %v2263, %v2265
        %v2267 = vadd.f32 %v2263, %v2266
        %vm2268 = vweird.f32 %v2262
        %vm2269 = vweird.f32 %v2263
        %vm2270 = vmor %vm2268, %vm2269
        %v2271 = vsel %vm2270, %v2263, %v2267
        %v2272 = vand.u32 2147483647, %v2262
        %vm2273 = vcmp.eq.f32.partialorder %v2272, 8.507059e+37
        %v2274 = vand.u32 %v2262, 2147483648
        %v2275 = vor.u32 1.1754944e-38, %v2274
        %v2276 = vsel %vm2273, %v2275, %v2271
        %v2277 = vmul.f32 %v2252, %v2276
        %v2278 = vmin.f32 %v2277, 1.0
        %v2279 = vmax.f32 %v2278, -1.0
        %v2280 = vmul.f32 %v2034, %v2034
        %v2281 = vmin.f32 16.0, %v2280
        %v2282 = vmul.f32 %v2281, 2.1237322e-06
        %v2283 = vadd.f32 %v2282, 0.00028619796
        %v2284 = vmul.f32 %v2281, %v2283
        %v2285 = vadd.f32 %v2284, 0.0036580483
        %v2286 = vmul.f32 %v2281, %v2285
        %v2287 = vadd.f32 %v2286, 0.05243302
        %v2288 = vmul.f32 %v2281, %v2287
        %v2289 = vadd.f32 %v2288, 0.18741608
        %v2290 = vmul.f32 %v2281, %v2289
        %v2291 = vadd.f32 %v2290, 1.1283791
        %v2292 = vmul.f32 %v2034, %v2291
        %v2293 = vmul.f32 %v2281, 3.8918573e-05
        %v2294 = vadd.f32 %v2293, 0.001143296
        %v2295 = vmul.f32 %v2281, %v2294
        %v2296 = vadd.f32 %v2295, 0.014752088
        %v2297 = vmul.f32 %v2281, %v2296
        %v2298 = vadd.f32 %v2297, 0.112945676
        %v2299 = vmul.f32 %v2281, %v2298
        %v2300 = vadd.f32 %v2299, 0.4994258
        %v2301 = vmul.f32 %v2281, %v2300
        %v2302 = vadd.f32 %v2301, 1.0
        %v2303 = vrcp.pop %v2302
        %v2304 = vmul.f32 %v2302, %v2303
        %v2305 = vsub.f32 1.0, %v2304
        %v2306 = vmul.f32 %v2303, %v2305
        %v2307 = vadd.f32 %v2303, %v2306
        %vm2308 = vweird.f32 %v2302
        %vm2309 = vweird.f32 %v2303
        %vm2310 = vmor %vm2308, %vm2309
        %v2311 = vsel %vm2310, %v2303, %v2307
        %v2312 = vand.u32 2147483647, %v2302
        %vm2313 = vcmp.eq.f32.partialorder %v2312, 8.507059e+37
        %v2314 = vand.u32 %v2302, 2147483648
        %v2315 = vor.u32 1.1754944e-38, %v2314
        %v2316 = vsel %vm2313, %v2315, %v2311
        %v2317 = vmul.f32 %v2292, %v2316
        %v2318 = vmin.f32 %v2317, 1.0
        %v2319 = vmax.f32 %v2318, -1.0
        %v2320 = vmul.f32 %v2035, %v2035
        %v2321 = vmin.f32 16.0, %v2320
        %v2322 = vmul.f32 %v2321, 2.1237322e-06
        %v2323 = vadd.f32 %v2322, 0.00028619796
        %v2324 = vmul.f32 %v2321, %v2323
        %v2325 = vadd.f32 %v2324, 0.0036580483
        %v2326 = vmul.f32 %v2321, %v2325
        %v2327 = vadd.f32 %v2326, 0.05243302
        %v2328 = vmul.f32 %v2321, %v2327
        %v2329 = vadd.f32 %v2328, 0.18741608
        %v2330 = vmul.f32 %v2321, %v2329
        %v2331 = vadd.f32 %v2330, 1.1283791
        %v2332 = vmul.f32 %v2035, %v2331
        %v2333 = vmul.f32 %v2321, 3.8918573e-05
        %v2334 = vadd.f32 %v2333, 0.001143296
        %v2335 = vmul.f32 %v2321, %v2334
        %v2336 = vadd.f32 %v2335, 0.014752088
        %v2337 = vmul.f32 %v2321, %v2336
        %v2338 = vadd.f32 %v2337, 0.112945676
        %v2339 = vmul.f32 %v2321, %v2338
        %v2340 = vadd.f32 %v2339, 0.4994258
        %v2341 = vmul.f32 %v2321, %v2340
        %v2342 = vadd.f32 %v2341, 1.0
        %v2343 = vrcp.pop %v2342
        %v2344 = vmul.f32 %v2342, %v2343
        %v2345 = vsub.f32 1.0, %v2344
        %v2346 = vmul.f32 %v2343, %v2345
        %v2347 = vadd.f32 %v2343, %v2346
        %vm2348 = vweird.f32 %v2342
        %vm2349 = vweird.f32 %v2343
        %vm2350 = vmor %vm2348, %vm2349
        %v2351 = vsel %vm2350, %v2343, %v2347
        %v2352 = vand.u32 2147483647, %v2342
        %vm2353 = vcmp.eq.f32.partialorder %v2352, 8.507059e+37
        %v2354 = vand.u32 %v2342, 2147483648
        %v2355 = vor.u32 1.1754944e-38, %v2354
        %v2356 = vsel %vm2353, %v2355, %v2351
        %v2357 = vmul.f32 %v2332, %v2356
        %v2358 = vmin.f32 %v2357, 1.0
        %v2359 = vmax.f32 %v2358, -1.0
        %v2360 = vmul.f32 %v2036, %v2036
        %v2361 = vmin.f32 16.0, %v2360
        %v2362 = vmul.f32 %v2361, 2.1237322e-06
        %v2363 = vadd.f32 %v2362, 0.00028619796
        %v2364 = vmul.f32 %v2361, %v2363
        %v2365 = vadd.f32 %v2364, 0.0036580483
        %v2366 = vmul.f32 %v2361, %v2365
        %v2367 = vadd.f32 %v2366, 0.05243302
        %v2368 = vmul.f32 %v2361, %v2367
        %v2369 = vadd.f32 %v2368, 0.18741608
        %v2370 = vmul.f32 %v2361, %v2369
        %v2371 = vadd.f32 %v2370, 1.1283791
        %v2372 = vmul.f32 %v2036, %v2371
        %v2373 = vmul.f32 %v2361, 3.8918573e-05
        %v2374 = vadd.f32 %v2373, 0.001143296
        %v2375 = vmul.f32 %v2361, %v2374
        %v2376 = vadd.f32 %v2375, 0.014752088
        %v2377 = vmul.f32 %v2361, %v2376
        %v2378 = vadd.f32 %v2377, 0.112945676
        %v2379 = vmul.f32 %v2361, %v2378
        %v2380 = vadd.f32 %v2379, 0.4994258
        %v2381 = vmul.f32 %v2361, %v2380
        %v2382 = vadd.f32 %v2381, 1.0
        %v2383 = vrcp.pop %v2382
        %v2384 = vmul.f32 %v2382, %v2383
        %v2385 = vsub.f32 1.0, %v2384
        %v2386 = vmul.f32 %v2383, %v2385
        %v2387 = vadd.f32 %v2383, %v2386
        %vm2388 = vweird.f32 %v2382
        %vm2389 = vweird.f32 %v2383
        %vm2390 = vmor %vm2388, %vm2389
        %v2391 = vsel %vm2390, %v2383, %v2387
        %v2392 = vand.u32 2147483647, %v2382
        %vm2393 = vcmp.eq.f32.partialorder %v2392, 8.507059e+37
        %v2394 = vand.u32 %v2382, 2147483648
        %v2395 = vor.u32 1.1754944e-38, %v2394
        %v2396 = vsel %vm2393, %v2395, %v2391
        %v2397 = vmul.f32 %v2372, %v2396
        %v2398 = vmin.f32 %v2397, 1.0
        %v2399 = vmax.f32 %v2398, -1.0
        %v2400 = vmul.f32 %v2037, %v2037
        %v2401 = vmin.f32 16.0, %v2400
        %v2402 = vmul.f32 %v2401, 2.1237322e-06
        %v2403 = vadd.f32 %v2402, 0.00028619796
        %v2404 = vmul.f32 %v2401, %v2403
        %v2405 = vadd.f32 %v2404, 0.0036580483
        %v2406 = vmul.f32 %v2401, %v2405
        %v2407 = vadd.f32 %v2406, 0.05243302
        %v2408 = vmul.f32 %v2401, %v2407
        %v2409 = vadd.f32 %v2408, 0.18741608
        %v2410 = vmul.f32 %v2401, %v2409
        %v2411 = vadd.f32 %v2410, 1.1283791
        %v2412 = vmul.f32 %v2037, %v2411
        %v2413 = vmul.f32 %v2401, 3.8918573e-05
        %v2414 = vadd.f32 %v2413, 0.001143296
        %v2415 = vmul.f32 %v2401, %v2414
        %v2416 = vadd.f32 %v2415, 0.014752088
        %v2417 = vmul.f32 %v2401, %v2416
        %v2418 = vadd.f32 %v2417, 0.112945676
        %v2419 = vmul.f32 %v2401, %v2418
        %v2420 = vadd.f32 %v2419, 0.4994258
        %v2421 = vmul.f32 %v2401, %v2420
        %v2422 = vadd.f32 %v2421, 1.0
        %v2423 = vrcp.pop %v2422
        %v2424 = vmul.f32 %v2422, %v2423
        %v2425 = vsub.f32 1.0, %v2424
        %v2426 = vmul.f32 %v2423, %v2425
        %v2427 = vadd.f32 %v2423, %v2426
        %vm2428 = vweird.f32 %v2422
        %vm2429 = vweird.f32 %v2423
        %vm2430 = vmor %vm2428, %vm2429
        %v2431 = vsel %vm2430, %v2423, %v2427
        %v2432 = vand.u32 2147483647, %v2422
        %vm2433 = vcmp.eq.f32.partialorder %v2432, 8.507059e+37
        %v2434 = vand.u32 %v2422, 2147483648
        %v2435 = vor.u32 1.1754944e-38, %v2434
        %v2436 = vsel %vm2433, %v2435, %v2431
        %v2437 = vmul.f32 %v2412, %v2436
        %v2438 = vmin.f32 %v2437, 1.0
        %v2439 = vmax.f32 %v2438, -1.0
        %v2440 = vmul.f32 %v2038, %v2038
        %v2441 = vmin.f32 16.0, %v2440
        %v2442 = vmul.f32 %v2441, 2.1237322e-06
        %v2443 = vadd.f32 %v2442, 0.00028619796
        %v2444 = vmul.f32 %v2441, %v2443
        %v2445 = vadd.f32 %v2444, 0.0036580483
        %v2446 = vmul.f32 %v2441, %v2445
        %v2447 = vadd.f32 %v2446, 0.05243302
        %v2448 = vmul.f32 %v2441, %v2447
        %v2449 = vadd.f32 %v2448, 0.18741608
        %v2450 = vmul.f32 %v2441, %v2449
        %v2451 = vadd.f32 %v2450, 1.1283791
        %v2452 = vmul.f32 %v2038, %v2451
        %v2453 = vmul.f32 %v2441, 3.8918573e-05
        %v2454 = vadd.f32 %v2453, 0.001143296
        %v2455 = vmul.f32 %v2441, %v2454
        %v2456 = vadd.f32 %v2455, 0.014752088
        %v2457 = vmul.f32 %v2441, %v2456
        %v2458 = vadd.f32 %v2457, 0.112945676
        %v2459 = vmul.f32 %v2441, %v2458
        %v2460 = vadd.f32 %v2459, 0.4994258
        %v2461 = vmul.f32 %v2441, %v2460
        %v2462 = vadd.f32 %v2461, 1.0
        %v2463 = vrcp.pop %v2462
        %v2464 = vmul.f32 %v2462, %v2463
        %v2465 = vsub.f32 1.0, %v2464
        %v2466 = vmul.f32 %v2463, %v2465
        %v2467 = vadd.f32 %v2463, %v2466
        %vm2468 = vweird.f32 %v2462
        %vm2469 = vweird.f32 %v2463
        %vm2470 = vmor %vm2468, %vm2469
        %v2471 = vsel %vm2470, %v2463, %v2467
        %v2472 = vand.u32 2147483647, %v2462
        %vm2473 = vcmp.eq.f32.partialorder %v2472, 8.507059e+37
        %v2474 = vand.u32 %v2462, 2147483648
        %v2475 = vor.u32 1.1754944e-38, %v2474
        %v2476 = vsel %vm2473, %v2475, %v2471
        %v2477 = vmul.f32 %v2452, %v2476
        %v2478 = vmin.f32 %v2477, 1.0
        %v2479 = vmax.f32 %v2478, -1.0
        %v2480 = vmul.f32 %v2039, %v2039
        %v2481 = vmin.f32 16.0, %v2480
        %v2482 = vmul.f32 %v2481, 2.1237322e-06
        %v2483 = vadd.f32 %v2482, 0.00028619796
        %v2484 = vmul.f32 %v2481, %v2483
        %v2485 = vadd.f32 %v2484, 0.0036580483
        %v2486 = vmul.f32 %v2481, %v2485
        %v2487 = vadd.f32 %v2486, 0.05243302
        %v2488 = vmul.f32 %v2481, %v2487
        %v2489 = vadd.f32 %v2488, 0.18741608
        %v2490 = vmul.f32 %v2481, %v2489
        %v2491 = vadd.f32 %v2490, 1.1283791
        %v2492 = vmul.f32 %v2039, %v2491
        %v2493 = vmul.f32 %v2481, 3.8918573e-05
        %v2494 = vadd.f32 %v2493, 0.001143296
        %v2495 = vmul.f32 %v2481, %v2494
        %v2496 = vadd.f32 %v2495, 0.014752088
        %v2497 = vmul.f32 %v2481, %v2496
        %v2498 = vadd.f32 %v2497, 0.112945676
        %v2499 = vmul.f32 %v2481, %v2498
        %v2500 = vadd.f32 %v2499, 0.4994258
        %v2501 = vmul.f32 %v2481, %v2500
        %v2502 = vadd.f32 %v2501, 1.0
        %v2503 = vrcp.pop %v2502
        %v2504 = vmul.f32 %v2502, %v2503
        %v2505 = vsub.f32 1.0, %v2504
        %v2506 = vmul.f32 %v2503, %v2505
        %v2507 = vadd.f32 %v2503, %v2506
        %vm2508 = vweird.f32 %v2502
        %vm2509 = vweird.f32 %v2503
        %vm2510 = vmor %vm2508, %vm2509
        %v2511 = vsel %vm2510, %v2503, %v2507
        %v2512 = vand.u32 2147483647, %v2502
        %vm2513 = vcmp.eq.f32.partialorder %v2512, 8.507059e+37
        %v2514 = vand.u32 %v2502, 2147483648
        %v2515 = vor.u32 1.1754944e-38, %v2514
        %v2516 = vsel %vm2513, %v2515, %v2511
        %v2517 = vmul.f32 %v2492, %v2516
        %v2518 = vmin.f32 %v2517, 1.0
        %v2519 = vmax.f32 %v2518, -1.0
        %v2520 = vadd.f32 %v2079, 1.0
        %v2521 = vadd.f32 %v2119, 1.0
        %v2522 = vadd.f32 %v2159, 1.0
        %v2523 = vadd.f32 %v2199, 1.0
        %v2524 = vadd.f32 %v2239, 1.0
        %v2525 = vadd.f32 %v2279, 1.0
        %v2526 = vadd.f32 %v2319, 1.0
        %v2527 = vadd.f32 %v2359, 1.0
        %v2528 = vadd.f32 %v2399, 1.0
        %v2529 = vadd.f32 %v2439, 1.0
        %v2530 = vadd.f32 %v2479, 1.0
        %v2531 = vadd.f32 %v2519, 1.0
        %v2532 = vmul.f32 %v2016, %v2520
        %v2533 = vmul.f32 %v2017, %v2521
        %v2534 = vmul.f32 %v2018, %v2522
        %v2535 = vmul.f32 %v2019, %v2523
        %v2536 = vmul.f32 %v2020, %v2524
        %v2537 = vmul.f32 %v2021, %v2525
        %v2538 = vmul.f32 %v2022, %v2526
        %v2539 = vmul.f32 %v2023, %v2527
        %v2540 = vmul.f32 %v2024, %v2528
        %v2541 = vmul.f32 %v2025, %v2529
        %v2542 = vmul.f32 %v2026, %v2530
        %v2543 = vmul.f32 %v2027, %v2531
        %2544 = vst [vmem:[%s185] sm:$0xff] %v2532
        %2545 = vst [vmem:[%s185 + $0x8] sm:$0xff] %v2533
        %2546 = vst [vmem:[%s185 + $0x10] sm:$0xff] %v2534
        %2547 = vst [vmem:[%s185 + $0x18] sm:$0xff] %v2535
        %2548 = vst [vmem:[%s185 + $0x20] sm:$0xff] %v2536
        %2549 = vst [vmem:[%s185 + $0x28] sm:$0xff] %v2537
        %2550 = vst [vmem:[%s185 + $0x30] sm:$0xff] %v2538
        %2551 = vst [vmem:[%s185 + $0x38] sm:$0xff] %v2539
        %2552 = vst [vmem:[%s185 + $0x40] sm:$0xff] %v2540
        %2553 = vst [vmem:[%s185 + $0x48] sm:$0xff] %v2541
        %2554 = vst [vmem:[%s185 + $0x50] sm:$0xff] %v2542
        %2555 = vst [vmem:[%s185 + $0x58] sm:$0xff] %v2543
        %s2556 = sand.u32 %s109, 1
        %s2557 = scalar_lea.sflag [#allocation3], %s2556
        %s2558 = sand.u32 %s109, 1
        %s2559 = smul.addr %s2558, 96
        %s2560 = scalar_lea.vmem [#allocation2], %s2559
        // Predicated region
        $region33: #{tpu_custom_call.1} parent=31 // pred_check
          %p2561 = pneg %p119
        $region34: #{tpu_custom_call.1} parent=31 // pred_check_branch
          %2563 = sbr.rel (%p2561) target = $region36
        $region35: #{tpu_custom_call.1} parent=31 // pred_region
          %s2564 = smul.u32 12, %s22
          %2566 = vsyncadd %s2557, 0
          %s2567 = smul.addr %s21, 12
          %s2568 = sadd.s32 %s2564, %s2567
          %s2569 = smul.addr %s2568, 8
          %s2570 = scalar_lea.hbm %s3, %s2569
          %s2571 = sshll.u32 %s2560, 4
          %s2572 = int_to_ptr.vmem [resolvable:$true] %s2571
          %s2573 = sshll.u32 %s2570, 4
          %s2574 = int_to_ptr.hbm [resolvable:$true] %s2573
          %2579 = dma.vmem_to_hbm [thread:$0]  %s2572, 1536, %s2574, %s2557, 128, 128, 8
        $region36: #{tpu_custom_call.1} parent=31 // pred_fallthru
          _
      $region32: #{tpu_custom_call.1} parent=5 // pred_fallthru
        _
      %p2580 = scmp.le.s32.totalorder 2, %s12
      // Predicated region
      $region37: #{tpu_custom_call.1} parent=5 // pred_check
        %p2581 = pneg %p2580
      $region38: #{tpu_custom_call.1} parent=5 // pred_check_branch
        %2583 = sbr.rel (%p2581) target = $region40
      $region39: #{tpu_custom_call.1} parent=5 // pred_region
        %s2584 = ssub.s32 %s12, 2
        // Predicated region
        $region41: #{tpu_custom_call.1} parent=39 // pred_check
          %p2585 = pneg %p125
        $region42: #{tpu_custom_call.1} parent=39 // pred_check_branch
          %2587 = sbr.rel (%p2585) target = $region44
        $region43: #{tpu_custom_call.1} parent=39 // pred_region
          %s2588 = sand.u32 %s110, 1
          %s2589 = scalar_lea.sflag [#allocation3], %s2588
          %s2590 = sand.u32 %s110, 1
          %s2591 = smul.addr %s2590, 96
          %s2592 = scalar_lea.vmem [#allocation2], %s2591
          %2594 = dma.done %s2589, 1536
        $region44: #{tpu_custom_call.1} parent=39 // pred_fallthru
          _
      $region40: #{tpu_custom_call.1} parent=5 // pred_fallthru
        _
    $region6: #{tpu_custom_call.1} parent=1 // loop_footer
      %s16 = sadd.s32 1, %s12
    $region7: #{tpu_custom_call.1} parent=1 // loop_footer_branch
      %11 = sbr.rel target = $region3
    $region8: #{tpu_custom_call.1} parent=1 // loop_exit
      _
    %2595 = vsyncpa [#allocation3], 1
    %s2596 = scalar_lea.sflag [#allocation3], 1
    %2597 = vsyncpa %s2596, 1

</llo_original>
